<compile_context>
chip_gen: v5e
topology: v5e:2x2
jax: 0.10.0
libtpu: 0.0.40
codegen_flags: <defaults>
</compile_context>

<pallas_src>
import functools

import jax
import jax.numpy as jnp
from jax.experimental import pallas as pl
from jax.experimental.pallas import tpu as pltpu

NEG_PAD = -1e30  # large finite negative for padded logit lanes (never -inf)


def mlp_softmax_kernel(x_ref, p_ref, out_ref, *, n_in, n_mid, n_out):
    # Unpack the resident parameter slab with static (zero-cost) slices.
    r = 0
    w1 = p_ref[r:r + n_in, :];  r += n_in      # (n_in,  n_mid)
    b1 = p_ref[r:r + 1, :];     r += 1         # (1,     n_mid)
    w2 = p_ref[r:r + n_mid, :]; r += n_mid     # (n_mid, n_mid)
    b2 = p_ref[r:r + 1, :];     r += 1         # (1,     n_mid)
    w3 = p_ref[r:r + n_mid, :]; r += n_mid     # (n_mid, n_mid) cols>=n_out are 0
    b3 = p_ref[r:r + 1, :]                     # (1,     n_mid) cols>=n_out are -1e30

    x = x_ref[...]                                                # (TB, n_in)
    h1 = jnp.maximum(
        jnp.dot(x, w1, preferred_element_type=jnp.float32) + b1, 0.0)
    h2 = jnp.maximum(
        jnp.dot(h1, w2, preferred_element_type=jnp.float32) + b2, 0.0)
    # Padded lanes get logit ~ -1e30 -> exp underflows to exactly 0.
    logits = jnp.dot(h2, w3, preferred_element_type=jnp.float32) + b3  # (TB, n_mid)

    # Numerically stable softmax over the last axis; exact division so rows
    # sum to 1 at f32 precision (approx reciprocal caused visible bias).
    m = jnp.max(logits, axis=-1, keepdims=True)
    e = jnp.exp(logits - m)
    denom = jnp.sum(e, axis=-1, keepdims=True)
    probs = e / denom

    out_ref[...] = probs[:, :n_out]


def pack_params(params, n_in, n_mid, n_out):
    """Pack (w1,b1,w2,b2,w3,b3) into one (n_in+2*n_mid+3, n_mid) f32 slab."""
    assert n_out <= n_mid, "packing assumes n_out <= n_mid"
    w1, b1, w2, b2, w3, b3 = params
    w3p = jnp.zeros((n_mid, n_mid), jnp.float32).at[:, :n_out].set(w3)
    b3p = jnp.full((1, n_mid), NEG_PAD, jnp.float32).at[:, :n_out].set(b3)
    return jnp.concatenate([w1, b1, w2, b2, w3p, b3p], axis=0)


def net_forward(x, params, *, tile_b=512):
    """softmax(fc3(relu(fc2(relu(fc1(x))))), dim=1) via a Pallas kernel.

    tile_b: rows per grid step.  Default gives a single step for B<=512
    (overhead-bound regime).  On v7x, pass tile_b ~= round_up(B/2, 8) to give
    both TensorCores a step; on v5e/v6e one big tile is preferable.
    """
    w1, b1, w2, b2, w3, b3 = params
    B, n_in = x.shape
    n_mid = w1.shape[1]
    n_out = w3.shape[1]

    tile_b = max(8, (min(tile_b, max(B, 8)) + 7) // 8 * 8)  # multiple of 8
    n_tiles = pl.cdiv(B, tile_b)
    b_pad = n_tiles * tile_b
    if b_pad != B:
        x = jnp.pad(x, ((0, b_pad - B), (0, 0)))

    packed = pack_params(params, n_in, n_mid, n_out)

    kernel = functools.partial(
        mlp_softmax_kernel, n_in=n_in, n_mid=n_mid, n_out=n_out)

    cost = pl.CostEstimate(
        flops=2 * b_pad * (n_in * n_mid + n_mid * n_mid + n_mid * n_mid),
        transcendentals=b_pad * n_mid,
        bytes_accessed=(x.size + packed.size + b_pad * n_out) * 4,
    )

    out = pl.pallas_call(
        kernel,
        out_shape=jax.ShapeDtypeStruct((b_pad, n_out), jnp.float32),
        grid=(n_tiles,),
        in_specs=[
            pl.BlockSpec((tile_b, n_in), lambda i: (i, 0)),
            # Full-array block, constant index_map -> VMEM-resident params.
            pl.BlockSpec(packed.shape, lambda i: (0, 0)),
        ],
        out_specs=pl.BlockSpec((tile_b, n_out), lambda i: (i, 0)),
        compiler_params=pltpu.CompilerParams(
            dimension_semantics=("parallel",)),
        cost_estimate=cost,
    )(x, packed)

    if b_pad != B:
        out = out[:B]
    return out


def init_params(key, n_in, n_mid, n_out):
    """Deterministic init mimicking nn.Linear's uniform(-1/sqrt(fan_in), ...)."""
    ks = jax.random.split(key, 6)

    def linear(kw, kb, fan_in, fan_out):
        bound = 1.0 / jnp.sqrt(fan_in)
        w = jax.random.uniform(kw, (fan_in, fan_out), jnp.float32, -bound, bound)
        b = jax.random.uniform(kb, (1, fan_out), jnp.float32, -bound, bound)
        return w, b

    w1, b1 = linear(ks[0], ks[1], n_in, n_mid)
    w2, b2 = linear(ks[2], ks[3], n_mid, n_mid)
    w3, b3 = linear(ks[4], ks[5], n_mid, n_out)
    return (w1, b1, w2, b2, w3, b3)


if __name__ == "__main__":
    key = jax.random.PRNGKey(0)
    n_in, n_mid, n_out = 4, 32, 2          # REINFORCE / CartPole-like sizes
    B = 512                                # batched rollout states
    kx, kp = jax.random.split(key)
    x = jax.random.normal(kx, (B, n_in), dtype=jnp.float32)
    params = init_params(kp, n_in, n_mid, n_out)

    prob = net_forward(x, params, tile_b=512)   # single grid step for B=512
    prob = jax.block_until_ready(prob)

    # sanity: shape + rows sum to 1 (softmax over dim=1, exact division)
    assert prob.shape == (B, n_out)
    assert jnp.allclose(jnp.sum(prob, axis=1), 1.0, atol=1e-5)

    # cross-check against pure-JAX reference
    w1, b1, w2, b2, w3, b3 = params
    h1 = jnp.maximum(x @ w1 + b1, 0.0)
    h2 = jnp.maximum(h1 @ w2 + b2, 0.0)
    ref = jax.nn.softmax(h2 @ w3 + b3, axis=1)
    assert jnp.allclose(prob, ref, atol=1e-4, rtol=1e-4)

    print("KERNEL_OK")
</pallas_src>

<mosaic_0001>
module attributes {stable_mosaic.version = 11 : i64} {
  func.func @mlp_softmax_kernel(%arg0: i32, %arg1: memref<512x4xf32, #tpu.memory_space<vmem>>, %arg2: memref<71x32xf32, #tpu.memory_space<vmem>>, %arg3: memref<512x2xf32, #tpu.memory_space<vmem>>) attributes {dimension_semantics = [#tpu.dimension_semantics<parallel>], iteration_bounds = array<i64: 1>, scalar_prefetch = 0 : i64, scratch_operands = 0 : i64, tpu.core_type = #tpu.core_type<tc>, window_params = [{transform_indices = @transform_0, window_bounds = array<i64: 512, 4>}, {pipeline_mode = #tpu.pipeline_mode<synchronous>, transform_indices = @transform_1, window_bounds = array<i64: 71, 32>}, {transform_indices = @transform_2, window_bounds = array<i64: 512, 2>}]} {
    %c0 = arith.constant 0 : index
    %c0_0 = arith.constant 0 : index
    %0 = vector.load %arg2[%c0, %c0_0] : memref<71x32xf32, #tpu.memory_space<vmem>>, vector<4x32xf32>
    %c4 = arith.constant 4 : index
    %c0_1 = arith.constant 0 : index
    %1 = vector.load %arg2[%c4, %c0_1] : memref<71x32xf32, #tpu.memory_space<vmem>>, vector<1x32xf32>
    %c5 = arith.constant 5 : index
    %c0_2 = arith.constant 0 : index
    %2 = vector.load %arg2[%c5, %c0_2] : memref<71x32xf32, #tpu.memory_space<vmem>>, vector<32x32xf32>
    %c37 = arith.constant 37 : index
    %c0_3 = arith.constant 0 : index
    %3 = vector.load %arg2[%c37, %c0_3] : memref<71x32xf32, #tpu.memory_space<vmem>>, vector<1x32xf32>
    %c38 = arith.constant 38 : index
    %c0_4 = arith.constant 0 : index
    %4 = vector.load %arg2[%c38, %c0_4] : memref<71x32xf32, #tpu.memory_space<vmem>>, vector<32x32xf32>
    %c70 = arith.constant 70 : index
    %c0_5 = arith.constant 0 : index
    %5 = vector.load %arg2[%c70, %c0_5] : memref<71x32xf32, #tpu.memory_space<vmem>>, vector<1x32xf32>
    %c0_6 = arith.constant 0 : index
    %c0_7 = arith.constant 0 : index
    %6 = vector.load %arg1[%c0_6, %c0_7] : memref<512x4xf32, #tpu.memory_space<vmem>>, vector<512x4xf32>
    %cst = arith.constant dense<0.000000e+00> : vector<512x32xf32>
    %7 = tpu.matmul %6, %0, %cst {dimension_numbers = #tpu.dot_dimension_numbers<[1], [0], [0], [1], [0, 0, 1, 1], [], []>} : vector<512x4xf32>, vector<4x32xf32>, vector<512x32xf32> -> vector<512x32xf32>
    %8 = vector.broadcast %1 : vector<1x32xf32> to vector<512x32xf32>
    %9 = arith.addf %7, %8 : vector<512x32xf32>
    %cst_8 = arith.constant 0.000000e+00 : f32
    %10 = vector.broadcast %cst_8 : f32 to vector<512x32xf32>
    %11 = arith.maximumf %9, %10 : vector<512x32xf32>
    %cst_9 = arith.constant dense<0.000000e+00> : vector<512x32xf32>
    %12 = tpu.matmul %11, %2, %cst_9 {dimension_numbers = #tpu.dot_dimension_numbers<[1], [0], [0], [1], [0, 0, 1, 1], [], []>} : vector<512x32xf32>, vector<32x32xf32>, vector<512x32xf32> -> vector<512x32xf32>
    %13 = vector.broadcast %3 : vector<1x32xf32> to vector<512x32xf32>
    %14 = arith.addf %12, %13 : vector<512x32xf32>
    %cst_10 = arith.constant 0.000000e+00 : f32
    %15 = vector.broadcast %cst_10 : f32 to vector<512x32xf32>
    %16 = arith.maximumf %14, %15 : vector<512x32xf32>
    %cst_11 = arith.constant dense<0.000000e+00> : vector<512x32xf32>
    %17 = tpu.matmul %16, %4, %cst_11 {dimension_numbers = #tpu.dot_dimension_numbers<[1], [0], [0], [1], [0, 0, 1, 1], [], []>} : vector<512x32xf32>, vector<32x32xf32>, vector<512x32xf32> -> vector<512x32xf32>
    %18 = vector.broadcast %5 : vector<1x32xf32> to vector<512x32xf32>
    %19 = arith.addf %17, %18 : vector<512x32xf32>
    %cst_12 = arith.constant dense<0xFF800000> : vector<512xf32>
    %20 = vector.multi_reduction <maximumf>, %19, %cst_12 [1] : vector<512x32xf32> to vector<512xf32>
    %21 = vector.shape_cast %20 : vector<512xf32> to vector<512x1xf32>
    %22 = vector.broadcast %21 : vector<512x1xf32> to vector<512x32xf32>
    %23 = arith.subf %19, %22 : vector<512x32xf32>
    %24 = math.exp %23 : vector<512x32xf32>
    %cst_13 = arith.constant dense<0.000000e+00> : vector<512xf32>
    %25 = vector.multi_reduction <add>, %24, %cst_13 [1] : vector<512x32xf32> to vector<512xf32>
    %26 = vector.shape_cast %25 : vector<512xf32> to vector<512x1xf32>
    %27 = vector.broadcast %26 : vector<512x1xf32> to vector<512x32xf32>
    %28 = arith.divf %24, %27 : vector<512x32xf32>
    %29 = vector.extract_strided_slice %28 {offsets = [0, 0], sizes = [512, 2], strides = [1, 1]} : vector<512x32xf32> to vector<512x2xf32>
    %c0_14 = arith.constant 0 : index
    %c0_15 = arith.constant 0 : index
    %30 = vector.load %arg3[%c0_14, %c0_15] : memref<512x2xf32, #tpu.memory_space<vmem>>, vector<512x2xf32>
    tpu.vector_store %arg3[%c0_14, %c0_15], %29 {strides = array<i32>} : memref<512x2xf32, #tpu.memory_space<vmem>>, vector<512x2xf32>,
    return
  }
  func.func @transform_0(%arg0: i32) -> (i32, i32) {
    %c0_i32 = arith.constant 0 : i32
    %c0_i32_0 = arith.constant 0 : i32
    return %arg0, %c0_i32 : i32, i32
  }
  func.func @transform_1(%arg0: i32) -> (i32, i32) {
    %c0_i32 = arith.constant 0 : i32
    %c0_i32_0 = arith.constant 0 : i32
    %c0_i32_1 = arith.constant 0 : i32
    return %c0_i32, %c0_i32_0 : i32, i32
  }
  func.func @transform_2(%arg0: i32) -> (i32, i32) {
    %c0_i32 = arith.constant 0 : i32
    %c0_i32_0 = arith.constant 0 : i32
    return %arg0, %c0_i32 : i32, i32
  }
}

</mosaic_0001>

<llo_original>
// kernel: tpu_custom_call.1
$region0: #{tpu_custom_call.1}
  #allocation0 [shape = 'u32[]', space=smem, size = 0x4, offset = 0x4, fixed_abs, tag = 'smem constant byte address 0x4 - core index']
  #allocation1 [shape = 'u32[72,128]{1,0:T(1,128)}', space=vmem, size = 0x9000, scoped, tag = 'internal scratch']
  %s0 = inlined_call_operand.vmem [shape: f32[512,4], index: 0, kind: input, shape index: {}]
  %s1 = inlined_call_operand.vmem [shape: f32[71,32], index: 1, kind: input, shape index: {}]
  %s2 = inlined_call_operand.vmem [shape: f32[512,2], index: 2, kind: output, shape index: {}]
  %s3 = sld [smem:[#allocation0]]
  $region18: #{tpu_custom_call.1} parent=0
    _
  %s5 = ssub.s32 1, %s3
  %s6 = scalar_select 0, %s5, %s3
  // Predicated region
  $region2: #{tpu_custom_call.1} parent=0 // pred_check
    _
  $region3: #{tpu_custom_call.1} parent=0 // pred_check_branch
    %8 = sbr.rel (0) target = $region5
  $region4: #{tpu_custom_call.1} parent=0 // pred_region
    _
  $region5: #{tpu_custom_call.1} parent=0 // pred_fallthru
    _
  // Predicated region
  $region6: #{tpu_custom_call.1} parent=0 // pred_check
    _
  $region7: #{tpu_custom_call.1} parent=0 // pred_check_branch
    %10 = sbr.rel (0) target = $region9
  $region8: #{tpu_custom_call.1} parent=0 // pred_region
    _
  $region9: #{tpu_custom_call.1} parent=0 // pred_fallthru
    _
  %v11 = vld [vmem:[%s1] sm:$0xf]
  %v12 = vld [vmem:[%s1 + $0x4] sm:$0x1]
  %v13 = vld [vmem:[%s1 + $0x5] sm:$0xff]
  %v14 = vld [vmem:[%s1 + $0xd] sm:$0xff]
  %v15 = vld [vmem:[%s1 + $0x15] sm:$0xff]
  %v16 = vld [vmem:[%s1 + $0x1d] sm:$0xff]
  %v17 = vld [vmem:[%s1 + $0x25] sm:$0x1]
  %v18 = vld [vmem:[%s1 + $0x26] sm:$0xff]
  %v19 = vld [vmem:[%s1 + $0x2e] sm:$0xff]
  %v20 = vld [vmem:[%s1 + $0x36] sm:$0xff]
  %v21 = vld [vmem:[%s1 + $0x3e] sm:$0xff]
  %v22 = vld [vmem:[%s1 + $0x46] sm:$0x1]
  %v23 = vld [vmem:[%s0] sm:$0xff]
  %v24 = vld [vmem:[%s0 + $0x8] sm:$0xff]
  %v25 = vld [vmem:[%s0 + $0x10] sm:$0xff]
  %v26 = vld [vmem:[%s0 + $0x18] sm:$0xff]
  %v27 = vld [vmem:[%s0 + $0x20] sm:$0xff]
  %v28 = vld [vmem:[%s0 + $0x28] sm:$0xff]
  %v29 = vld [vmem:[%s0 + $0x30] sm:$0xff]
  %v30 = vld [vmem:[%s0 + $0x38] sm:$0xff]
  %v31 = vld [vmem:[%s0 + $0x40] sm:$0xff]
  %v32 = vld [vmem:[%s0 + $0x48] sm:$0xff]
  %v33 = vld [vmem:[%s0 + $0x50] sm:$0xff]
  %v34 = vld [vmem:[%s0 + $0x58] sm:$0xff]
  %v35 = vld [vmem:[%s0 + $0x60] sm:$0xff]
  %v36 = vld [vmem:[%s0 + $0x68] sm:$0xff]
  %v37 = vld [vmem:[%s0 + $0x70] sm:$0xff]
  %v38 = vld [vmem:[%s0 + $0x78] sm:$0xff]
  %v39 = vld [vmem:[%s0 + $0x80] sm:$0xff]
  %v40 = vld [vmem:[%s0 + $0x88] sm:$0xff]
  %v41 = vld [vmem:[%s0 + $0x90] sm:$0xff]
  %v42 = vld [vmem:[%s0 + $0x98] sm:$0xff]
  %v43 = vld [vmem:[%s0 + $0xa0] sm:$0xff]
  %v44 = vld [vmem:[%s0 + $0xa8] sm:$0xff]
  %v45 = vld [vmem:[%s0 + $0xb0] sm:$0xff]
  %v46 = vld [vmem:[%s0 + $0xb8] sm:$0xff]
  %v47 = vld [vmem:[%s0 + $0xc0] sm:$0xff]
  %v48 = vld [vmem:[%s0 + $0xc8] sm:$0xff]
  %v49 = vld [vmem:[%s0 + $0xd0] sm:$0xff]
  %v50 = vld [vmem:[%s0 + $0xd8] sm:$0xff]
  %v51 = vld [vmem:[%s0 + $0xe0] sm:$0xff]
  %v52 = vld [vmem:[%s0 + $0xe8] sm:$0xff]
  %v53 = vld [vmem:[%s0 + $0xf0] sm:$0xff]
  %v54 = vld [vmem:[%s0 + $0xf8] sm:$0xff]
  %v55 = vld [vmem:[%s0 + $0x100] sm:$0xff]
  %v56 = vld [vmem:[%s0 + $0x108] sm:$0xff]
  %v57 = vld [vmem:[%s0 + $0x110] sm:$0xff]
  %v58 = vld [vmem:[%s0 + $0x118] sm:$0xff]
  %v59 = vld [vmem:[%s0 + $0x120] sm:$0xff]
  %v60 = vld [vmem:[%s0 + $0x128] sm:$0xff]
  %v61 = vld [vmem:[%s0 + $0x130] sm:$0xff]
  %v62 = vld [vmem:[%s0 + $0x138] sm:$0xff]
  %v63 = vld [vmem:[%s0 + $0x140] sm:$0xff]
  %v64 = vld [vmem:[%s0 + $0x148] sm:$0xff]
  %v65 = vld [vmem:[%s0 + $0x150] sm:$0xff]
  %v66 = vld [vmem:[%s0 + $0x158] sm:$0xff]
  %v67 = vld [vmem:[%s0 + $0x160] sm:$0xff]
  %v68 = vld [vmem:[%s0 + $0x168] sm:$0xff]
  %v69 = vld [vmem:[%s0 + $0x170] sm:$0xff]
  %v70 = vld [vmem:[%s0 + $0x178] sm:$0xff]
  %v71 = vld [vmem:[%s0 + $0x180] sm:$0xff]
  %v72 = vld [vmem:[%s0 + $0x188] sm:$0xff]
  %v73 = vld [vmem:[%s0 + $0x190] sm:$0xff]
  %v74 = vld [vmem:[%s0 + $0x198] sm:$0xff]
  %v75 = vld [vmem:[%s0 + $0x1a0] sm:$0xff]
  %v76 = vld [vmem:[%s0 + $0x1a8] sm:$0xff]
  %v77 = vld [vmem:[%s0 + $0x1b0] sm:$0xff]
  %v78 = vld [vmem:[%s0 + $0x1b8] sm:$0xff]
  %v79 = vld [vmem:[%s0 + $0x1c0] sm:$0xff]
  %v80 = vld [vmem:[%s0 + $0x1c8] sm:$0xff]
  %v81 = vld [vmem:[%s0 + $0x1d0] sm:$0xff]
  %v82 = vld [vmem:[%s0 + $0x1d8] sm:$0xff]
  %v83 = vld [vmem:[%s0 + $0x1e0] sm:$0xff]
  %v84 = vld [vmem:[%s0 + $0x1e8] sm:$0xff]
  %v85 = vld [vmem:[%s0 + $0x1f0] sm:$0xff]
  %v86 = vld [vmem:[%s0 + $0x1f8] sm:$0xff]
  %v87 = vperm.slane %v12, 0
  %vm88 = vcmask 31744
  %v90 = vsel %vm88, %v23, 0
  %v93 = vsel %vm88, %v24, 0
  %v96 = vsel %vm88, %v25, 0
  %v99 = vsel %vm88, %v26, 0
  %v102 = vsel %vm88, %v27, 0
  %v105 = vsel %vm88, %v28, 0
  %v108 = vsel %vm88, %v29, 0
  %v111 = vsel %vm88, %v30, 0
  %v114 = vsel %vm88, %v31, 0
  %v117 = vsel %vm88, %v32, 0
  %v120 = vsel %vm88, %v33, 0
  %v123 = vsel %vm88, %v34, 0
  %v126 = vsel %vm88, %v35, 0
  %v129 = vsel %vm88, %v36, 0
  %v132 = vsel %vm88, %v37, 0
  %v135 = vsel %vm88, %v38, 0
  %v138 = vsel %vm88, %v39, 0
  %v141 = vsel %vm88, %v40, 0
  %v144 = vsel %vm88, %v41, 0
  %v147 = vsel %vm88, %v42, 0
  %v150 = vsel %vm88, %v43, 0
  %v153 = vsel %vm88, %v44, 0
  %v156 = vsel %vm88, %v45, 0
  %v159 = vsel %vm88, %v46, 0
  %v162 = vsel %vm88, %v47, 0
  %v165 = vsel %vm88, %v48, 0
  %v168 = vsel %vm88, %v49, 0
  %v171 = vsel %vm88, %v50, 0
  %v174 = vsel %vm88, %v51, 0
  %v177 = vsel %vm88, %v52, 0
  %v180 = vsel %vm88, %v53, 0
  %v183 = vsel %vm88, %v54, 0
  %v186 = vsel %vm88, %v55, 0
  %v189 = vsel %vm88, %v56, 0
  %v192 = vsel %vm88, %v57, 0
  %v195 = vsel %vm88, %v58, 0
  %v198 = vsel %vm88, %v59, 0
  %v201 = vsel %vm88, %v60, 0
  %v204 = vsel %vm88, %v61, 0
  %v207 = vsel %vm88, %v62, 0
  %v210 = vsel %vm88, %v63, 0
  %v213 = vsel %vm88, %v64, 0
  %v216 = vsel %vm88, %v65, 0
  %v219 = vsel %vm88, %v66, 0
  %v222 = vsel %vm88, %v67, 0
  %v225 = vsel %vm88, %v68, 0
  %v228 = vsel %vm88, %v69, 0
  %v231 = vsel %vm88, %v70, 0
  %v234 = vsel %vm88, %v71, 0
  %v237 = vsel %vm88, %v72, 0
  %v240 = vsel %vm88, %v73, 0
  %v243 = vsel %vm88, %v74, 0
  %v246 = vsel %vm88, %v75, 0
  %v249 = vsel %vm88, %v76, 0
  %v252 = vsel %vm88, %v77, 0
  %v255 = vsel %vm88, %v78, 0
  %v258 = vsel %vm88, %v79, 0
  %v261 = vsel %vm88, %v80, 0
  %v264 = vsel %vm88, %v81, 0
  %v267 = vsel %vm88, %v82, 0
  %v270 = vsel %vm88, %v83, 0
  %v273 = vsel %vm88, %v84, 0
  %v276 = vsel %vm88, %v85, 0
  %v279 = vsel %vm88, %v86, 0
  %vm281 = vcmask 1043456
  %v283 = vsel %vm281, %v11, 0
  %285 = vmatpush.msra.mxu0 0.0
  %286 = vmatpush.msra.mxu0 0.0
  %287 = vmatpush.msra.mxu0 0.0
  %288 = vmatpush.msra.mxu0 0.0
  %289 = vmatpush.msra.mxu0 0.0
  %290 = vmatpush.msra.mxu0 0.0
  %291 = vmatpush.msra.mxu0 0.0
  %292 = vmatpush.msra.mxu0 0.0
  %293 = vmatpush.msra.mxu0 0.0
  %294 = vmatpush.msra.mxu0 0.0
  %295 = vmatpush.msra.mxu0 0.0
  %296 = vmatpush.msra.mxu0 0.0
  %297 = vmatpush.msra.mxu0 0.0
  %298 = vmatpush.msra.mxu0 0.0
  %299 = vmatpush.msra.mxu0 0.0
  %300 = vmatpush.msra.mxu0 %v283
  %301 = vmatmul.f32.gmra.mxu0 %v90
  %v302 = vpop.f32.mrf.mxu0
  %v303 = vadd.f32 %v87, %v302
  %304 = vmatmul.f32.gmra.mxu0 %v93
  %v305 = vpop.f32.mrf.mxu0
  %v306 = vadd.f32 %v87, %v305
  %307 = vmatmul.f32.gmra.mxu0 %v96
  %v308 = vpop.f32.mrf.mxu0
  %v309 = vadd.f32 %v87, %v308
  %310 = vmatmul.f32.gmra.mxu0 %v99
  %v311 = vpop.f32.mrf.mxu0
  %v312 = vadd.f32 %v87, %v311
  %313 = vmatmul.f32.gmra.mxu0 %v102
  %v314 = vpop.f32.mrf.mxu0
  %v315 = vadd.f32 %v87, %v314
  %316 = vmatmul.f32.gmra.mxu0 %v105
  %v317 = vpop.f32.mrf.mxu0
  %v318 = vadd.f32 %v87, %v317
  %319 = vmatmul.f32.gmra.mxu0 %v108
  %v320 = vpop.f32.mrf.mxu0
  %v321 = vadd.f32 %v87, %v320
  %322 = vmatmul.f32.gmra.mxu0 %v111
  %v323 = vpop.f32.mrf.mxu0
  %v324 = vadd.f32 %v87, %v323
  %325 = vmatmul.f32.gmra.mxu0 %v114
  %v326 = vpop.f32.mrf.mxu0
  %v327 = vadd.f32 %v87, %v326
  %328 = vmatmul.f32.gmra.mxu0 %v117
  %v329 = vpop.f32.mrf.mxu0
  %v330 = vadd.f32 %v87, %v329
  %331 = vmatmul.f32.gmra.mxu0 %v120
  %v332 = vpop.f32.mrf.mxu0
  %v333 = vadd.f32 %v87, %v332
  %334 = vmatmul.f32.gmra.mxu0 %v123
  %v335 = vpop.f32.mrf.mxu0
  %v336 = vadd.f32 %v87, %v335
  %337 = vmatmul.f32.gmra.mxu0 %v126
  %v338 = vpop.f32.mrf.mxu0
  %v339 = vadd.f32 %v87, %v338
  %340 = vmatmul.f32.gmra.mxu0 %v129
  %v341 = vpop.f32.mrf.mxu0
  %v342 = vadd.f32 %v87, %v341
  %343 = vmatmul.f32.gmra.mxu0 %v132
  %v344 = vpop.f32.mrf.mxu0
  %v345 = vadd.f32 %v87, %v344
  %346 = vmatmul.f32.gmra.mxu0 %v135
  %v347 = vpop.f32.mrf.mxu0
  %v348 = vadd.f32 %v87, %v347
  %349 = vmatmul.f32.gmra.mxu0 %v138
  %v350 = vpop.f32.mrf.mxu0
  %v351 = vadd.f32 %v87, %v350
  %352 = vmatmul.f32.gmra.mxu0 %v141
  %v353 = vpop.f32.mrf.mxu0
  %v354 = vadd.f32 %v87, %v353
  %355 = vmatmul.f32.gmra.mxu0 %v144
  %v356 = vpop.f32.mrf.mxu0
  %v357 = vadd.f32 %v87, %v356
  %358 = vmatmul.f32.gmra.mxu0 %v147
  %v359 = vpop.f32.mrf.mxu0
  %v360 = vadd.f32 %v87, %v359
  %361 = vmatmul.f32.gmra.mxu0 %v150
  %v362 = vpop.f32.mrf.mxu0
  %v363 = vadd.f32 %v87, %v362
  %364 = vmatmul.f32.gmra.mxu0 %v153
  %v365 = vpop.f32.mrf.mxu0
  %v366 = vadd.f32 %v87, %v365
  %367 = vmatmul.f32.gmra.mxu0 %v156
  %v368 = vpop.f32.mrf.mxu0
  %v369 = vadd.f32 %v87, %v368
  %370 = vmatmul.f32.gmra.mxu0 %v159
  %v371 = vpop.f32.mrf.mxu0
  %v372 = vadd.f32 %v87, %v371
  %373 = vmatmul.f32.gmra.mxu0 %v162
  %v374 = vpop.f32.mrf.mxu0
  %v375 = vadd.f32 %v87, %v374
  %376 = vmatmul.f32.gmra.mxu0 %v165
  %v377 = vpop.f32.mrf.mxu0
  %v378 = vadd.f32 %v87, %v377
  %379 = vmatmul.f32.gmra.mxu0 %v168
  %v380 = vpop.f32.mrf.mxu0
  %v381 = vadd.f32 %v87, %v380
  %382 = vmatmul.f32.gmra.mxu0 %v171
  %v383 = vpop.f32.mrf.mxu0
  %v384 = vadd.f32 %v87, %v383
  %385 = vmatmul.f32.gmra.mxu0 %v174
  %v386 = vpop.f32.mrf.mxu0
  %v387 = vadd.f32 %v87, %v386
  %388 = vmatmul.f32.gmra.mxu0 %v177
  %v389 = vpop.f32.mrf.mxu0
  %v390 = vadd.f32 %v87, %v389
  %391 = vmatmul.f32.gmra.mxu0 %v180
  %v392 = vpop.f32.mrf.mxu0
  %v393 = vadd.f32 %v87, %v392
  %394 = vmatmul.f32.gmra.mxu0 %v183
  %v395 = vpop.f32.mrf.mxu0
  %v396 = vadd.f32 %v87, %v395
  %397 = vmatmul.f32.gmra.mxu0 %v186
  %v398 = vpop.f32.mrf.mxu0
  %v399 = vadd.f32 %v87, %v398
  %400 = vmatmul.f32.gmra.mxu0 %v189
  %v401 = vpop.f32.mrf.mxu0
  %v402 = vadd.f32 %v87, %v401
  %403 = vmatmul.f32.gmra.mxu0 %v192
  %v404 = vpop.f32.mrf.mxu0
  %v405 = vadd.f32 %v87, %v404
  %406 = vmatmul.f32.gmra.mxu0 %v195
  %v407 = vpop.f32.mrf.mxu0
  %v408 = vadd.f32 %v87, %v407
  %409 = vmatmul.f32.gmra.mxu0 %v198
  %v410 = vpop.f32.mrf.mxu0
  %v411 = vadd.f32 %v87, %v410
  %412 = vmatmul.f32.gmra.mxu0 %v201
  %v413 = vpop.f32.mrf.mxu0
  %v414 = vadd.f32 %v87, %v413
  %415 = vmatmul.f32.gmra.mxu0 %v204
  %v416 = vpop.f32.mrf.mxu0
  %v417 = vadd.f32 %v87, %v416
  %418 = vmatmul.f32.gmra.mxu0 %v207
  %v419 = vpop.f32.mrf.mxu0
  %v420 = vadd.f32 %v87, %v419
  %421 = vmatmul.f32.gmra.mxu0 %v210
  %v422 = vpop.f32.mrf.mxu0
  %v423 = vadd.f32 %v87, %v422
  %424 = vmatmul.f32.gmra.mxu0 %v213
  %v425 = vpop.f32.mrf.mxu0
  %v426 = vadd.f32 %v87, %v425
  %427 = vmatmul.f32.gmra.mxu0 %v216
  %v428 = vpop.f32.mrf.mxu0
  %v429 = vadd.f32 %v87, %v428
  %430 = vmatmul.f32.gmra.mxu0 %v219
  %v431 = vpop.f32.mrf.mxu0
  %v432 = vadd.f32 %v87, %v431
  %433 = vmatmul.f32.gmra.mxu0 %v222
  %v434 = vpop.f32.mrf.mxu0
  %v435 = vadd.f32 %v87, %v434
  %436 = vmatmul.f32.gmra.mxu0 %v225
  %v437 = vpop.f32.mrf.mxu0
  %v438 = vadd.f32 %v87, %v437
  %439 = vmatmul.f32.gmra.mxu0 %v228
  %v440 = vpop.f32.mrf.mxu0
  %v441 = vadd.f32 %v87, %v440
  %442 = vmatmul.f32.gmra.mxu0 %v231
  %v443 = vpop.f32.mrf.mxu0
  %v444 = vadd.f32 %v87, %v443
  %445 = vmatmul.f32.gmra.mxu0 %v234
  %v446 = vpop.f32.mrf.mxu0
  %v447 = vadd.f32 %v87, %v446
  %448 = vmatmul.f32.gmra.mxu0 %v237
  %v449 = vpop.f32.mrf.mxu0
  %v450 = vadd.f32 %v87, %v449
  %451 = vmatmul.f32.gmra.mxu0 %v240
  %v452 = vpop.f32.mrf.mxu0
  %v453 = vadd.f32 %v87, %v452
  %454 = vmatmul.f32.gmra.mxu0 %v243
  %v455 = vpop.f32.mrf.mxu0
  %v456 = vadd.f32 %v87, %v455
  %457 = vmatmul.f32.gmra.mxu0 %v246
  %v458 = vpop.f32.mrf.mxu0
  %v459 = vadd.f32 %v87, %v458
  %460 = vmatmul.f32.gmra.mxu0 %v249
  %v461 = vpop.f32.mrf.mxu0
  %v462 = vadd.f32 %v87, %v461
  %463 = vmatmul.f32.gmra.mxu0 %v252
  %v464 = vpop.f32.mrf.mxu0
  %v465 = vadd.f32 %v87, %v464
  %466 = vmatmul.f32.gmra.mxu0 %v255
  %v467 = vpop.f32.mrf.mxu0
  %v468 = vadd.f32 %v87, %v467
  %469 = vmatmul.f32.gmra.mxu0 %v258
  %v470 = vpop.f32.mrf.mxu0
  %v471 = vadd.f32 %v87, %v470
  %472 = vmatmul.f32.gmra.mxu0 %v261
  %v473 = vpop.f32.mrf.mxu0
  %v474 = vadd.f32 %v87, %v473
  %475 = vmatmul.f32.gmra.mxu0 %v264
  %v476 = vpop.f32.mrf.mxu0
  %v477 = vadd.f32 %v87, %v476
  %478 = vmatmul.f32.gmra.mxu0 %v267
  %v479 = vpop.f32.mrf.mxu0
  %v480 = vadd.f32 %v87, %v479
  %481 = vmatmul.f32.gmra.mxu0 %v270
  %v482 = vpop.f32.mrf.mxu0
  %v483 = vadd.f32 %v87, %v482
  %484 = vmatmul.f32.gmra.mxu0 %v273
  %v485 = vpop.f32.mrf.mxu0
  %v486 = vadd.f32 %v87, %v485
  %487 = vmatmul.f32.gmra.mxu0 %v276
  %v488 = vpop.f32.mrf.mxu0
  %v489 = vadd.f32 %v87, %v488
  %490 = vmatmul.f32.gmra.mxu0 %v279
  %v491 = vpop.f32.mrf.mxu0
  %v492 = vadd.f32 %v87, %v491
  %493 = vdwg.mxu0
  %v494 = vmax.f32 %v303, 0.0
  %v495 = vmax.f32 %v306, 0.0
  %v496 = vmax.f32 %v309, 0.0
  %v497 = vmax.f32 %v312, 0.0
  %v498 = vmax.f32 %v315, 0.0
  %v499 = vmax.f32 %v318, 0.0
  %v500 = vmax.f32 %v321, 0.0
  %v501 = vmax.f32 %v324, 0.0
  %v502 = vmax.f32 %v327, 0.0
  %v503 = vmax.f32 %v330, 0.0
  %v504 = vmax.f32 %v333, 0.0
  %v505 = vmax.f32 %v336, 0.0
  %v506 = vmax.f32 %v339, 0.0
  %v507 = vmax.f32 %v342, 0.0
  %v508 = vmax.f32 %v345, 0.0
  %v509 = vmax.f32 %v348, 0.0
  %v510 = vmax.f32 %v351, 0.0
  %v511 = vmax.f32 %v354, 0.0
  %v512 = vmax.f32 %v357, 0.0
  %v513 = vmax.f32 %v360, 0.0
  %v514 = vmax.f32 %v363, 0.0
  %v515 = vmax.f32 %v366, 0.0
  %v516 = vmax.f32 %v369, 0.0
  %v517 = vmax.f32 %v372, 0.0
  %v518 = vmax.f32 %v375, 0.0
  %v519 = vmax.f32 %v378, 0.0
  %v520 = vmax.f32 %v381, 0.0
  %v521 = vmax.f32 %v384, 0.0
  %v522 = vmax.f32 %v387, 0.0
  %v523 = vmax.f32 %v390, 0.0
  %v524 = vmax.f32 %v393, 0.0
  %v525 = vmax.f32 %v396, 0.0
  %v526 = vmax.f32 %v399, 0.0
  %v527 = vmax.f32 %v402, 0.0
  %v528 = vmax.f32 %v405, 0.0
  %v529 = vmax.f32 %v408, 0.0
  %v530 = vmax.f32 %v411, 0.0
  %v531 = vmax.f32 %v414, 0.0
  %v532 = vmax.f32 %v417, 0.0
  %v533 = vmax.f32 %v420, 0.0
  %v534 = vmax.f32 %v423, 0.0
  %v535 = vmax.f32 %v426, 0.0
  %v536 = vmax.f32 %v429, 0.0
  %v537 = vmax.f32 %v432, 0.0
  %v538 = vmax.f32 %v435, 0.0
  %v539 = vmax.f32 %v438, 0.0
  %v540 = vmax.f32 %v441, 0.0
  %v541 = vmax.f32 %v444, 0.0
  %v542 = vmax.f32 %v447, 0.0
  %v543 = vmax.f32 %v450, 0.0
  %v544 = vmax.f32 %v453, 0.0
  %v545 = vmax.f32 %v456, 0.0
  %v546 = vmax.f32 %v459, 0.0
  %v547 = vmax.f32 %v462, 0.0
  %v548 = vmax.f32 %v465, 0.0
  %v549 = vmax.f32 %v468, 0.0
  %v550 = vmax.f32 %v471, 0.0
  %v551 = vmax.f32 %v474, 0.0
  %v552 = vmax.f32 %v477, 0.0
  %v553 = vmax.f32 %v480, 0.0
  %v554 = vmax.f32 %v483, 0.0
  %v555 = vmax.f32 %v486, 0.0
  %v556 = vmax.f32 %v489, 0.0
  %v557 = vmax.f32 %v492, 0.0
  %v558 = vperm.slane %v17, 0
  %vm559 = vcmask 261120
  %v561 = vsel %vm559, %v494, 0
  %v564 = vsel %vm559, %v495, 0
  %v567 = vsel %vm559, %v496, 0
  %v570 = vsel %vm559, %v497, 0
  %v573 = vsel %vm559, %v498, 0
  %v576 = vsel %vm559, %v499, 0
  %v579 = vsel %vm559, %v500, 0
  %v582 = vsel %vm559, %v501, 0
  %v585 = vsel %vm559, %v502, 0
  %v588 = vsel %vm559, %v503, 0
  %v591 = vsel %vm559, %v504, 0
  %v594 = vsel %vm559, %v505, 0
  %v597 = vsel %vm559, %v506, 0
  %v600 = vsel %vm559, %v507, 0
  %v603 = vsel %vm559, %v508, 0
  %v606 = vsel %vm559, %v509, 0
  %v609 = vsel %vm559, %v510, 0
  %v612 = vsel %vm559, %v511, 0
  %v615 = vsel %vm559, %v512, 0
  %v618 = vsel %vm559, %v513, 0
  %v621 = vsel %vm559, %v514, 0
  %v624 = vsel %vm559, %v515, 0
  %v627 = vsel %vm559, %v516, 0
  %v630 = vsel %vm559, %v517, 0
  %v633 = vsel %vm559, %v518, 0
  %v636 = vsel %vm559, %v519, 0
  %v639 = vsel %vm559, %v520, 0
  %v642 = vsel %vm559, %v521, 0
  %v645 = vsel %vm559, %v522, 0
  %v648 = vsel %vm559, %v523, 0
  %v651 = vsel %vm559, %v524, 0
  %v654 = vsel %vm559, %v525, 0
  %v657 = vsel %vm559, %v526, 0
  %v660 = vsel %vm559, %v527, 0
  %v663 = vsel %vm559, %v528, 0
  %v666 = vsel %vm559, %v529, 0
  %v669 = vsel %vm559, %v530, 0
  %v672 = vsel %vm559, %v531, 0
  %v675 = vsel %vm559, %v532, 0
  %v678 = vsel %vm559, %v533, 0
  %v681 = vsel %vm559, %v534, 0
  %v684 = vsel %vm559, %v535, 0
  %v687 = vsel %vm559, %v536, 0
  %v690 = vsel %vm559, %v537, 0
  %v693 = vsel %vm559, %v538, 0
  %v696 = vsel %vm559, %v539, 0
  %v699 = vsel %vm559, %v540, 0
  %v702 = vsel %vm559, %v541, 0
  %v705 = vsel %vm559, %v542, 0
  %v708 = vsel %vm559, %v543, 0
  %v711 = vsel %vm559, %v544, 0
  %v714 = vsel %vm559, %v545, 0
  %v717 = vsel %vm559, %v546, 0
  %v720 = vsel %vm559, %v547, 0
  %v723 = vsel %vm559, %v548, 0
  %v726 = vsel %vm559, %v549, 0
  %v729 = vsel %vm559, %v550, 0
  %v732 = vsel %vm559, %v551, 0
  %v735 = vsel %vm559, %v552, 0
  %v738 = vsel %vm559, %v553, 0
  %v741 = vsel %vm559, %v554, 0
  %v744 = vsel %vm559, %v555, 0
  %v747 = vsel %vm559, %v556, 0
  %v750 = vsel %vm559, %v557, 0
  %752 = vmatpush.msra.mxu0 0.0
  %753 = vmatpush.msra.mxu0 0.0
  %754 = vmatpush.msra.mxu0 0.0
  %755 = vmatpush.msra.mxu0 0.0
  %756 = vmatpush.msra.mxu0 0.0
  %757 = vmatpush.msra.mxu0 0.0
  %758 = vmatpush.msra.mxu0 0.0
  %759 = vmatpush.msra.mxu0 0.0
  %760 = vmatpush.msra.mxu0 0.0
  %761 = vmatpush.msra.mxu0 0.0
  %762 = vmatpush.msra.mxu0 0.0
  %763 = vmatpush.msra.mxu0 0.0
  %764 = vmatpush.msra.mxu0 %v16
  %765 = vmatpush.msra.mxu0 %v15
  %766 = vmatpush.msra.mxu0 %v14
  %767 = vmatpush.msra.mxu0 %v13
  %768 = vmatmul.f32.gmra.mxu0 %v561
  %v769 = vpop.f32.mrf.mxu0
  %v770 = vadd.f32 %v558, %v769
  %771 = vmatmul.f32.gmra.mxu0 %v564
  %v772 = vpop.f32.mrf.mxu0
  %v773 = vadd.f32 %v558, %v772
  %774 = vmatmul.f32.gmra.mxu0 %v567
  %v775 = vpop.f32.mrf.mxu0
  %v776 = vadd.f32 %v558, %v775
  %777 = vmatmul.f32.gmra.mxu0 %v570
  %v778 = vpop.f32.mrf.mxu0
  %v779 = vadd.f32 %v558, %v778
  %780 = vmatmul.f32.gmra.mxu0 %v573
  %v781 = vpop.f32.mrf.mxu0
  %v782 = vadd.f32 %v558, %v781
  %783 = vmatmul.f32.gmra.mxu0 %v576
  %v784 = vpop.f32.mrf.mxu0
  %v785 = vadd.f32 %v558, %v784
  %786 = vmatmul.f32.gmra.mxu0 %v579
  %v787 = vpop.f32.mrf.mxu0
  %v788 = vadd.f32 %v558, %v787
  %789 = vmatmul.f32.gmra.mxu0 %v582
  %v790 = vpop.f32.mrf.mxu0
  %v791 = vadd.f32 %v558, %v790
  %792 = vmatmul.f32.gmra.mxu0 %v585
  %v793 = vpop.f32.mrf.mxu0
  %v794 = vadd.f32 %v558, %v793
  %795 = vmatmul.f32.gmra.mxu0 %v588
  %v796 = vpop.f32.mrf.mxu0
  %v797 = vadd.f32 %v558, %v796
  %798 = vmatmul.f32.gmra.mxu0 %v591
  %v799 = vpop.f32.mrf.mxu0
  %v800 = vadd.f32 %v558, %v799
  %801 = vmatmul.f32.gmra.mxu0 %v594
  %v802 = vpop.f32.mrf.mxu0
  %v803 = vadd.f32 %v558, %v802
  %804 = vmatmul.f32.gmra.mxu0 %v597
  %v805 = vpop.f32.mrf.mxu0
  %v806 = vadd.f32 %v558, %v805
  %807 = vmatmul.f32.gmra.mxu0 %v600
  %v808 = vpop.f32.mrf.mxu0
  %v809 = vadd.f32 %v558, %v808
  %810 = vmatmul.f32.gmra.mxu0 %v603
  %v811 = vpop.f32.mrf.mxu0
  %v812 = vadd.f32 %v558, %v811
  %813 = vmatmul.f32.gmra.mxu0 %v606
  %v814 = vpop.f32.mrf.mxu0
  %v815 = vadd.f32 %v558, %v814
  %816 = vmatmul.f32.gmra.mxu0 %v609
  %v817 = vpop.f32.mrf.mxu0
  %v818 = vadd.f32 %v558, %v817
  %819 = vmatmul.f32.gmra.mxu0 %v612
  %v820 = vpop.f32.mrf.mxu0
  %v821 = vadd.f32 %v558, %v820
  %822 = vmatmul.f32.gmra.mxu0 %v615
  %v823 = vpop.f32.mrf.mxu0
  %v824 = vadd.f32 %v558, %v823
  %825 = vmatmul.f32.gmra.mxu0 %v618
  %v826 = vpop.f32.mrf.mxu0
  %v827 = vadd.f32 %v558, %v826
  %828 = vmatmul.f32.gmra.mxu0 %v621
  %v829 = vpop.f32.mrf.mxu0
  %v830 = vadd.f32 %v558, %v829
  %831 = vmatmul.f32.gmra.mxu0 %v624
  %v832 = vpop.f32.mrf.mxu0
  %v833 = vadd.f32 %v558, %v832
  %834 = vmatmul.f32.gmra.mxu0 %v627
  %v835 = vpop.f32.mrf.mxu0
  %v836 = vadd.f32 %v558, %v835
  %837 = vmatmul.f32.gmra.mxu0 %v630
  %v838 = vpop.f32.mrf.mxu0
  %v839 = vadd.f32 %v558, %v838
  %840 = vmatmul.f32.gmra.mxu0 %v633
  %v841 = vpop.f32.mrf.mxu0
  %v842 = vadd.f32 %v558, %v841
  %843 = vmatmul.f32.gmra.mxu0 %v636
  %v844 = vpop.f32.mrf.mxu0
  %v845 = vadd.f32 %v558, %v844
  %846 = vmatmul.f32.gmra.mxu0 %v639
  %v847 = vpop.f32.mrf.mxu0
  %v848 = vadd.f32 %v558, %v847
  %849 = vmatmul.f32.gmra.mxu0 %v642
  %v850 = vpop.f32.mrf.mxu0
  %v851 = vadd.f32 %v558, %v850
  %852 = vmatmul.f32.gmra.mxu0 %v645
  %v853 = vpop.f32.mrf.mxu0
  %v854 = vadd.f32 %v558, %v853
  %855 = vmatmul.f32.gmra.mxu0 %v648
  %v856 = vpop.f32.mrf.mxu0
  %v857 = vadd.f32 %v558, %v856
  %858 = vmatmul.f32.gmra.mxu0 %v651
  %v859 = vpop.f32.mrf.mxu0
  %v860 = vadd.f32 %v558, %v859
  %861 = vmatmul.f32.gmra.mxu0 %v654
  %v862 = vpop.f32.mrf.mxu0
  %v863 = vadd.f32 %v558, %v862
  %864 = vmatmul.f32.gmra.mxu0 %v657
  %v865 = vpop.f32.mrf.mxu0
  %v866 = vadd.f32 %v558, %v865
  %867 = vmatmul.f32.gmra.mxu0 %v660
  %v868 = vpop.f32.mrf.mxu0
  %v869 = vadd.f32 %v558, %v868
  %870 = vmatmul.f32.gmra.mxu0 %v663
  %v871 = vpop.f32.mrf.mxu0
  %v872 = vadd.f32 %v558, %v871
  %873 = vmatmul.f32.gmra.mxu0 %v666
  %v874 = vpop.f32.mrf.mxu0
  %v875 = vadd.f32 %v558, %v874
  %876 = vmatmul.f32.gmra.mxu0 %v669
  %v877 = vpop.f32.mrf.mxu0
  %v878 = vadd.f32 %v558, %v877
  %879 = vmatmul.f32.gmra.mxu0 %v672
  %v880 = vpop.f32.mrf.mxu0
  %v881 = vadd.f32 %v558, %v880
  %882 = vmatmul.f32.gmra.mxu0 %v675
  %v883 = vpop.f32.mrf.mxu0
  %v884 = vadd.f32 %v558, %v883
  %885 = vmatmul.f32.gmra.mxu0 %v678
  %v886 = vpop.f32.mrf.mxu0
  %v887 = vadd.f32 %v558, %v886
  %888 = vmatmul.f32.gmra.mxu0 %v681
  %v889 = vpop.f32.mrf.mxu0
  %v890 = vadd.f32 %v558, %v889
  %891 = vmatmul.f32.gmra.mxu0 %v684
  %v892 = vpop.f32.mrf.mxu0
  %v893 = vadd.f32 %v558, %v892
  %894 = vmatmul.f32.gmra.mxu0 %v687
  %v895 = vpop.f32.mrf.mxu0
  %v896 = vadd.f32 %v558, %v895
  %897 = vmatmul.f32.gmra.mxu0 %v690
  %v898 = vpop.f32.mrf.mxu0
  %v899 = vadd.f32 %v558, %v898
  %900 = vmatmul.f32.gmra.mxu0 %v693
  %v901 = vpop.f32.mrf.mxu0
  %v902 = vadd.f32 %v558, %v901
  %903 = vmatmul.f32.gmra.mxu0 %v696
  %v904 = vpop.f32.mrf.mxu0
  %v905 = vadd.f32 %v558, %v904
  %906 = vmatmul.f32.gmra.mxu0 %v699
  %v907 = vpop.f32.mrf.mxu0
  %v908 = vadd.f32 %v558, %v907
  %909 = vmatmul.f32.gmra.mxu0 %v702
  %v910 = vpop.f32.mrf.mxu0
  %v911 = vadd.f32 %v558, %v910
  %912 = vmatmul.f32.gmra.mxu0 %v705
  %v913 = vpop.f32.mrf.mxu0
  %v914 = vadd.f32 %v558, %v913
  %915 = vmatmul.f32.gmra.mxu0 %v708
  %v916 = vpop.f32.mrf.mxu0
  %v917 = vadd.f32 %v558, %v916
  %918 = vmatmul.f32.gmra.mxu0 %v711
  %v919 = vpop.f32.mrf.mxu0
  %v920 = vadd.f32 %v558, %v919
  %921 = vmatmul.f32.gmra.mxu0 %v714
  %v922 = vpop.f32.mrf.mxu0
  %v923 = vadd.f32 %v558, %v922
  %924 = vmatmul.f32.gmra.mxu0 %v717
  %v925 = vpop.f32.mrf.mxu0
  %v926 = vadd.f32 %v558, %v925
  %927 = vmatmul.f32.gmra.mxu0 %v720
  %v928 = vpop.f32.mrf.mxu0
  %v929 = vadd.f32 %v558, %v928
  %930 = vmatmul.f32.gmra.mxu0 %v723
  %v931 = vpop.f32.mrf.mxu0
  %v932 = vadd.f32 %v558, %v931
  %933 = vmatmul.f32.gmra.mxu0 %v726
  %v934 = vpop.f32.mrf.mxu0
  %v935 = vadd.f32 %v558, %v934
  %936 = vmatmul.f32.gmra.mxu0 %v729
  %v937 = vpop.f32.mrf.mxu0
  %v938 = vadd.f32 %v558, %v937
  %939 = vmatmul.f32.gmra.mxu0 %v732
  %v940 = vpop.f32.mrf.mxu0
  %v941 = vadd.f32 %v558, %v940
  %942 = vmatmul.f32.gmra.mxu0 %v735
  %v943 = vpop.f32.mrf.mxu0
  %v944 = vadd.f32 %v558, %v943
  %945 = vmatmul.f32.gmra.mxu0 %v738
  %v946 = vpop.f32.mrf.mxu0
  %v947 = vadd.f32 %v558, %v946
  %948 = vmatmul.f32.gmra.mxu0 %v741
  %v949 = vpop.f32.mrf.mxu0
  %v950 = vadd.f32 %v558, %v949
  %951 = vmatmul.f32.gmra.mxu0 %v744
  %v952 = vpop.f32.mrf.mxu0
  %v953 = vadd.f32 %v558, %v952
  %954 = vmatmul.f32.gmra.mxu0 %v747
  %v955 = vpop.f32.mrf.mxu0
  %v956 = vadd.f32 %v558, %v955
  %957 = vmatmul.f32.gmra.mxu0 %v750
  %v958 = vpop.f32.mrf.mxu0
  %v959 = vadd.f32 %v558, %v958
  %960 = vdwg.mxu0
  %v961 = vmax.f32 %v770, 0.0
  %v962 = vmax.f32 %v773, 0.0
  %v963 = vmax.f32 %v776, 0.0
  %v964 = vmax.f32 %v779, 0.0
  %v965 = vmax.f32 %v782, 0.0
  %v966 = vmax.f32 %v785, 0.0
  %v967 = vmax.f32 %v788, 0.0
  %v968 = vmax.f32 %v791, 0.0
  %v969 = vmax.f32 %v794, 0.0
  %v970 = vmax.f32 %v797, 0.0
  %v971 = vmax.f32 %v800, 0.0
  %v972 = vmax.f32 %v803, 0.0
  %v973 = vmax.f32 %v806, 0.0
  %v974 = vmax.f32 %v809, 0.0
  %v975 = vmax.f32 %v812, 0.0
  %v976 = vmax.f32 %v815, 0.0
  %v977 = vmax.f32 %v818, 0.0
  %v978 = vmax.f32 %v821, 0.0
  %v979 = vmax.f32 %v824, 0.0
  %v980 = vmax.f32 %v827, 0.0
  %v981 = vmax.f32 %v830, 0.0
  %v982 = vmax.f32 %v833, 0.0
  %v983 = vmax.f32 %v836, 0.0
  %v984 = vmax.f32 %v839, 0.0
  %v985 = vmax.f32 %v842, 0.0
  %v986 = vmax.f32 %v845, 0.0
  %v987 = vmax.f32 %v848, 0.0
  %v988 = vmax.f32 %v851, 0.0
  %v989 = vmax.f32 %v854, 0.0
  %v990 = vmax.f32 %v857, 0.0
  %v991 = vmax.f32 %v860, 0.0
  %v992 = vmax.f32 %v863, 0.0
  %v993 = vmax.f32 %v866, 0.0
  %v994 = vmax.f32 %v869, 0.0
  %v995 = vmax.f32 %v872, 0.0
  %v996 = vmax.f32 %v875, 0.0
  %v997 = vmax.f32 %v878, 0.0
  %v998 = vmax.f32 %v881, 0.0
  %v999 = vmax.f32 %v884, 0.0
  %v1000 = vmax.f32 %v887, 0.0
  %v1001 = vmax.f32 %v890, 0.0
  %v1002 = vmax.f32 %v893, 0.0
  %v1003 = vmax.f32 %v896, 0.0
  %v1004 = vmax.f32 %v899, 0.0
  %v1005 = vmax.f32 %v902, 0.0
  %v1006 = vmax.f32 %v905, 0.0
  %v1007 = vmax.f32 %v908, 0.0
  %v1008 = vmax.f32 %v911, 0.0
  %v1009 = vmax.f32 %v914, 0.0
  %v1010 = vmax.f32 %v917, 0.0
  %v1011 = vmax.f32 %v920, 0.0
  %v1012 = vmax.f32 %v923, 0.0
  %v1013 = vmax.f32 %v926, 0.0
  %v1014 = vmax.f32 %v929, 0.0
  %v1015 = vmax.f32 %v932, 0.0
  %v1016 = vmax.f32 %v935, 0.0
  %v1017 = vmax.f32 %v938, 0.0
  %v1018 = vmax.f32 %v941, 0.0
  %v1019 = vmax.f32 %v944, 0.0
  %v1020 = vmax.f32 %v947, 0.0
  %v1021 = vmax.f32 %v950, 0.0
  %v1022 = vmax.f32 %v953, 0.0
  %v1023 = vmax.f32 %v956, 0.0
  %v1024 = vmax.f32 %v959, 0.0
  %v1025 = vperm.slane %v22, 0
  %v1027 = vsel %vm559, %v961, 0
  %v1030 = vsel %vm559, %v962, 0
  %v1033 = vsel %vm559, %v963, 0
  %v1036 = vsel %vm559, %v964, 0
  %v1039 = vsel %vm559, %v965, 0
  %v1042 = vsel %vm559, %v966, 0
  %v1045 = vsel %vm559, %v967, 0
  %v1048 = vsel %vm559, %v968, 0
  %v1051 = vsel %vm559, %v969, 0
  %v1054 = vsel %vm559, %v970, 0
  %v1057 = vsel %vm559, %v971, 0
  %v1060 = vsel %vm559, %v972, 0
  %v1063 = vsel %vm559, %v973, 0
  %v1066 = vsel %vm559, %v974, 0
  %v1069 = vsel %vm559, %v975, 0
  %v1072 = vsel %vm559, %v976, 0
  %v1075 = vsel %vm559, %v977, 0
  %v1078 = vsel %vm559, %v978, 0
  %v1081 = vsel %vm559, %v979, 0
  %v1084 = vsel %vm559, %v980, 0
  %v1087 = vsel %vm559, %v981, 0
  %v1090 = vsel %vm559, %v982, 0
  %v1093 = vsel %vm559, %v983, 0
  %v1096 = vsel %vm559, %v984, 0
  %v1099 = vsel %vm559, %v985, 0
  %v1102 = vsel %vm559, %v986, 0
  %v1105 = vsel %vm559, %v987, 0
  %v1108 = vsel %vm559, %v988, 0
  %v1111 = vsel %vm559, %v989, 0
  %v1114 = vsel %vm559, %v990, 0
  %v1117 = vsel %vm559, %v991, 0
  %v1120 = vsel %vm559, %v992, 0
  %v1123 = vsel %vm559, %v993, 0
  %v1126 = vsel %vm559, %v994, 0
  %v1129 = vsel %vm559, %v995, 0
  %v1132 = vsel %vm559, %v996, 0
  %v1135 = vsel %vm559, %v997, 0
  %v1138 = vsel %vm559, %v998, 0
  %v1141 = vsel %vm559, %v999, 0
  %v1144 = vsel %vm559, %v1000, 0
  %v1147 = vsel %vm559, %v1001, 0
  %v1150 = vsel %vm559, %v1002, 0
  %v1153 = vsel %vm559, %v1003, 0
  %v1156 = vsel %vm559, %v1004, 0
  %v1159 = vsel %vm559, %v1005, 0
  %v1162 = vsel %vm559, %v1006, 0
  %v1165 = vsel %vm559, %v1007, 0
  %v1168 = vsel %vm559, %v1008, 0
  %v1171 = vsel %vm559, %v1009, 0
  %v1174 = vsel %vm559, %v1010, 0
  %v1177 = vsel %vm559, %v1011, 0
  %v1180 = vsel %vm559, %v1012, 0
  %v1183 = vsel %vm559, %v1013, 0
  %v1186 = vsel %vm559, %v1014, 0
  %v1189 = vsel %vm559, %v1015, 0
  %v1192 = vsel %vm559, %v1016, 0
  %v1195 = vsel %vm559, %v1017, 0
  %v1198 = vsel %vm559, %v1018, 0
  %v1201 = vsel %vm559, %v1019, 0
  %v1204 = vsel %vm559, %v1020, 0
  %v1207 = vsel %vm559, %v1021, 0
  %v1210 = vsel %vm559, %v1022, 0
  %v1213 = vsel %vm559, %v1023, 0
  %v1216 = vsel %vm559, %v1024, 0
  %1218 = vmatpush.msra.mxu0 0.0
  %1219 = vmatpush.msra.mxu0 0.0
  %1220 = vmatpush.msra.mxu0 0.0
  %1221 = vmatpush.msra.mxu0 0.0
  %1222 = vmatpush.msra.mxu0 0.0
  %1223 = vmatpush.msra.mxu0 0.0
  %1224 = vmatpush.msra.mxu0 0.0
  %1225 = vmatpush.msra.mxu0 0.0
  %1226 = vmatpush.msra.mxu0 0.0
  %1227 = vmatpush.msra.mxu0 0.0
  %1228 = vmatpush.msra.mxu0 0.0
  %1229 = vmatpush.msra.mxu0 0.0
  %1230 = vmatpush.msra.mxu0 %v21
  %1231 = vmatpush.msra.mxu0 %v20
  %1232 = vmatpush.msra.mxu0 %v19
  %1233 = vmatpush.msra.mxu0 %v18
  %1234 = vmatmul.f32.gmra.mxu0 %v1027
  %v1235 = vpop.f32.mrf.mxu0
  %v1236 = vadd.f32 %v1025, %v1235
  %1237 = vmatmul.f32.gmra.mxu0 %v1030
  %v1238 = vpop.f32.mrf.mxu0
  %v1239 = vadd.f32 %v1025, %v1238
  %1240 = vmatmul.f32.gmra.mxu0 %v1033
  %v1241 = vpop.f32.mrf.mxu0
  %v1242 = vadd.f32 %v1025, %v1241
  %1243 = vmatmul.f32.gmra.mxu0 %v1036
  %v1244 = vpop.f32.mrf.mxu0
  %v1245 = vadd.f32 %v1025, %v1244
  %1246 = vmatmul.f32.gmra.mxu0 %v1039
  %v1247 = vpop.f32.mrf.mxu0
  %v1248 = vadd.f32 %v1025, %v1247
  %1249 = vmatmul.f32.gmra.mxu0 %v1042
  %v1250 = vpop.f32.mrf.mxu0
  %v1251 = vadd.f32 %v1025, %v1250
  %1252 = vmatmul.f32.gmra.mxu0 %v1045
  %v1253 = vpop.f32.mrf.mxu0
  %v1254 = vadd.f32 %v1025, %v1253
  %1255 = vmatmul.f32.gmra.mxu0 %v1048
  %v1256 = vpop.f32.mrf.mxu0
  %v1257 = vadd.f32 %v1025, %v1256
  %1258 = vmatmul.f32.gmra.mxu0 %v1051
  %v1259 = vpop.f32.mrf.mxu0
  %v1260 = vadd.f32 %v1025, %v1259
  %1261 = vmatmul.f32.gmra.mxu0 %v1054
  %v1262 = vpop.f32.mrf.mxu0
  %v1263 = vadd.f32 %v1025, %v1262
  %1264 = vmatmul.f32.gmra.mxu0 %v1057
  %v1265 = vpop.f32.mrf.mxu0
  %v1266 = vadd.f32 %v1025, %v1265
  %1267 = vmatmul.f32.gmra.mxu0 %v1060
  %v1268 = vpop.f32.mrf.mxu0
  %v1269 = vadd.f32 %v1025, %v1268
  %1270 = vmatmul.f32.gmra.mxu0 %v1063
  %v1271 = vpop.f32.mrf.mxu0
  %v1272 = vadd.f32 %v1025, %v1271
  %1273 = vmatmul.f32.gmra.mxu0 %v1066
  %v1274 = vpop.f32.mrf.mxu0
  %v1275 = vadd.f32 %v1025, %v1274
  %1276 = vmatmul.f32.gmra.mxu0 %v1069
  %v1277 = vpop.f32.mrf.mxu0
  %v1278 = vadd.f32 %v1025, %v1277
  %1279 = vmatmul.f32.gmra.mxu0 %v1072
  %v1280 = vpop.f32.mrf.mxu0
  %v1281 = vadd.f32 %v1025, %v1280
  %1282 = vmatmul.f32.gmra.mxu0 %v1075
  %v1283 = vpop.f32.mrf.mxu0
  %v1284 = vadd.f32 %v1025, %v1283
  %1285 = vmatmul.f32.gmra.mxu0 %v1078
  %v1286 = vpop.f32.mrf.mxu0
  %v1287 = vadd.f32 %v1025, %v1286
  %1288 = vmatmul.f32.gmra.mxu0 %v1081
  %v1289 = vpop.f32.mrf.mxu0
  %v1290 = vadd.f32 %v1025, %v1289
  %1291 = vmatmul.f32.gmra.mxu0 %v1084
  %v1292 = vpop.f32.mrf.mxu0
  %v1293 = vadd.f32 %v1025, %v1292
  %1294 = vmatmul.f32.gmra.mxu0 %v1087
  %v1295 = vpop.f32.mrf.mxu0
  %v1296 = vadd.f32 %v1025, %v1295
  %1297 = vmatmul.f32.gmra.mxu0 %v1090
  %v1298 = vpop.f32.mrf.mxu0
  %v1299 = vadd.f32 %v1025, %v1298
  %1300 = vmatmul.f32.gmra.mxu0 %v1093
  %v1301 = vpop.f32.mrf.mxu0
  %v1302 = vadd.f32 %v1025, %v1301
  %1303 = vmatmul.f32.gmra.mxu0 %v1096
  %v1304 = vpop.f32.mrf.mxu0
  %v1305 = vadd.f32 %v1025, %v1304
  %1306 = vmatmul.f32.gmra.mxu0 %v1099
  %v1307 = vpop.f32.mrf.mxu0
  %v1308 = vadd.f32 %v1025, %v1307
  %1309 = vmatmul.f32.gmra.mxu0 %v1102
  %v1310 = vpop.f32.mrf.mxu0
  %v1311 = vadd.f32 %v1025, %v1310
  %1312 = vmatmul.f32.gmra.mxu0 %v1105
  %v1313 = vpop.f32.mrf.mxu0
  %v1314 = vadd.f32 %v1025, %v1313
  %1315 = vmatmul.f32.gmra.mxu0 %v1108
  %v1316 = vpop.f32.mrf.mxu0
  %v1317 = vadd.f32 %v1025, %v1316
  %1318 = vmatmul.f32.gmra.mxu0 %v1111
  %v1319 = vpop.f32.mrf.mxu0
  %v1320 = vadd.f32 %v1025, %v1319
  %1321 = vmatmul.f32.gmra.mxu0 %v1114
  %v1322 = vpop.f32.mrf.mxu0
  %v1323 = vadd.f32 %v1025, %v1322
  %1324 = vmatmul.f32.gmra.mxu0 %v1117
  %v1325 = vpop.f32.mrf.mxu0
  %v1326 = vadd.f32 %v1025, %v1325
  %1327 = vmatmul.f32.gmra.mxu0 %v1120
  %v1328 = vpop.f32.mrf.mxu0
  %v1329 = vadd.f32 %v1025, %v1328
  %1330 = vmatmul.f32.gmra.mxu0 %v1123
  %v1331 = vpop.f32.mrf.mxu0
  %v1332 = vadd.f32 %v1025, %v1331
  %1333 = vmatmul.f32.gmra.mxu0 %v1126
  %v1334 = vpop.f32.mrf.mxu0
  %v1335 = vadd.f32 %v1025, %v1334
  %1336 = vmatmul.f32.gmra.mxu0 %v1129
  %v1337 = vpop.f32.mrf.mxu0
  %v1338 = vadd.f32 %v1025, %v1337
  %1339 = vmatmul.f32.gmra.mxu0 %v1132
  %v1340 = vpop.f32.mrf.mxu0
  %v1341 = vadd.f32 %v1025, %v1340
  %1342 = vmatmul.f32.gmra.mxu0 %v1135
  %v1343 = vpop.f32.mrf.mxu0
  %v1344 = vadd.f32 %v1025, %v1343
  %1345 = vmatmul.f32.gmra.mxu0 %v1138
  %v1346 = vpop.f32.mrf.mxu0
  %v1347 = vadd.f32 %v1025, %v1346
  %1348 = vmatmul.f32.gmra.mxu0 %v1141
  %v1349 = vpop.f32.mrf.mxu0
  %v1350 = vadd.f32 %v1025, %v1349
  %1351 = vmatmul.f32.gmra.mxu0 %v1144
  %v1352 = vpop.f32.mrf.mxu0
  %v1353 = vadd.f32 %v1025, %v1352
  %1354 = vmatmul.f32.gmra.mxu0 %v1147
  %v1355 = vpop.f32.mrf.mxu0
  %v1356 = vadd.f32 %v1025, %v1355
  %1357 = vmatmul.f32.gmra.mxu0 %v1150
  %v1358 = vpop.f32.mrf.mxu0
  %v1359 = vadd.f32 %v1025, %v1358
  %1360 = vmatmul.f32.gmra.mxu0 %v1153
  %v1361 = vpop.f32.mrf.mxu0
  %v1362 = vadd.f32 %v1025, %v1361
  %1363 = vmatmul.f32.gmra.mxu0 %v1156
  %v1364 = vpop.f32.mrf.mxu0
  %v1365 = vadd.f32 %v1025, %v1364
  %1366 = vmatmul.f32.gmra.mxu0 %v1159
  %v1367 = vpop.f32.mrf.mxu0
  %v1368 = vadd.f32 %v1025, %v1367
  %1369 = vmatmul.f32.gmra.mxu0 %v1162
  %v1370 = vpop.f32.mrf.mxu0
  %v1371 = vadd.f32 %v1025, %v1370
  %1372 = vmatmul.f32.gmra.mxu0 %v1165
  %v1373 = vpop.f32.mrf.mxu0
  %v1374 = vadd.f32 %v1025, %v1373
  %1375 = vmatmul.f32.gmra.mxu0 %v1168
  %v1376 = vpop.f32.mrf.mxu0
  %v1377 = vadd.f32 %v1025, %v1376
  %1378 = vmatmul.f32.gmra.mxu0 %v1171
  %v1379 = vpop.f32.mrf.mxu0
  %v1380 = vadd.f32 %v1025, %v1379
  %1381 = vmatmul.f32.gmra.mxu0 %v1174
  %v1382 = vpop.f32.mrf.mxu0
  %v1383 = vadd.f32 %v1025, %v1382
  %1384 = vmatmul.f32.gmra.mxu0 %v1177
  %v1385 = vpop.f32.mrf.mxu0
  %v1386 = vadd.f32 %v1025, %v1385
  %1387 = vmatmul.f32.gmra.mxu0 %v1180
  %v1388 = vpop.f32.mrf.mxu0
  %v1389 = vadd.f32 %v1025, %v1388
  %1390 = vmatmul.f32.gmra.mxu0 %v1183
  %v1391 = vpop.f32.mrf.mxu0
  %v1392 = vadd.f32 %v1025, %v1391
  %1393 = vmatmul.f32.gmra.mxu0 %v1186
  %v1394 = vpop.f32.mrf.mxu0
  %v1395 = vadd.f32 %v1025, %v1394
  %1396 = vmatmul.f32.gmra.mxu0 %v1189
  %v1397 = vpop.f32.mrf.mxu0
  %v1398 = vadd.f32 %v1025, %v1397
  %1399 = vmatmul.f32.gmra.mxu0 %v1192
  %v1400 = vpop.f32.mrf.mxu0
  %v1401 = vadd.f32 %v1025, %v1400
  %1402 = vmatmul.f32.gmra.mxu0 %v1195
  %v1403 = vpop.f32.mrf.mxu0
  %v1404 = vadd.f32 %v1025, %v1403
  %1405 = vmatmul.f32.gmra.mxu0 %v1198
  %v1406 = vpop.f32.mrf.mxu0
  %v1407 = vadd.f32 %v1025, %v1406
  %1408 = vmatmul.f32.gmra.mxu0 %v1201
  %v1409 = vpop.f32.mrf.mxu0
  %v1410 = vadd.f32 %v1025, %v1409
  %1411 = vmatmul.f32.gmra.mxu0 %v1204
  %v1412 = vpop.f32.mrf.mxu0
  %v1413 = vadd.f32 %v1025, %v1412
  %1414 = vmatmul.f32.gmra.mxu0 %v1207
  %v1415 = vpop.f32.mrf.mxu0
  %v1416 = vadd.f32 %v1025, %v1415
  %1417 = vmatmul.f32.gmra.mxu0 %v1210
  %v1418 = vpop.f32.mrf.mxu0
  %v1419 = vadd.f32 %v1025, %v1418
  %1420 = vmatmul.f32.gmra.mxu0 %v1213
  %v1421 = vpop.f32.mrf.mxu0
  %v1422 = vadd.f32 %v1025, %v1421
  %1423 = vmatmul.f32.gmra.mxu0 %v1216
  %v1424 = vpop.f32.mrf.mxu0
  %v1425 = vadd.f32 %v1025, %v1424
  %1426 = vdwg.mxu0
  %v1427 = vsel %vm559, %v1236, -inf
  %1428 = vmax.xlane.f32.xlu0 %v1427
  %v1429 = vpop.xlane.xlu0 %1428
  %v1430 = vsel %vm559, %v1239, -inf
  %1431 = vmax.xlane.f32.xlu0 %v1430
  %v1432 = vpop.xlane.xlu0 %1431
  %v1433 = vsel %vm559, %v1242, -inf
  %1434 = vmax.xlane.f32.xlu0 %v1433
  %v1435 = vpop.xlane.xlu0 %1434
  %v1436 = vsel %vm559, %v1245, -inf
  %1437 = vmax.xlane.f32.xlu0 %v1436
  %v1438 = vpop.xlane.xlu0 %1437
  %v1439 = vsel %vm559, %v1248, -inf
  %1440 = vmax.xlane.f32.xlu0 %v1439
  %v1441 = vpop.xlane.xlu0 %1440
  %v1442 = vsel %vm559, %v1251, -inf
  %1443 = vmax.xlane.f32.xlu0 %v1442
  %v1444 = vpop.xlane.xlu0 %1443
  %v1445 = vsel %vm559, %v1254, -inf
  %1446 = vmax.xlane.f32.xlu0 %v1445
  %v1447 = vpop.xlane.xlu0 %1446
  %v1448 = vsel %vm559, %v1257, -inf
  %1449 = vmax.xlane.f32.xlu0 %v1448
  %v1450 = vpop.xlane.xlu0 %1449
  %v1451 = vsel %vm559, %v1260, -inf
  %1452 = vmax.xlane.f32.xlu0 %v1451
  %v1453 = vpop.xlane.xlu0 %1452
  %v1454 = vsel %vm559, %v1263, -inf
  %1455 = vmax.xlane.f32.xlu0 %v1454
  %v1456 = vpop.xlane.xlu0 %1455
  %v1457 = vsel %vm559, %v1266, -inf
  %1458 = vmax.xlane.f32.xlu0 %v1457
  %v1459 = vpop.xlane.xlu0 %1458
  %v1460 = vsel %vm559, %v1269, -inf
  %1461 = vmax.xlane.f32.xlu0 %v1460
  %v1462 = vpop.xlane.xlu0 %1461
  %v1463 = vsel %vm559, %v1272, -inf
  %1464 = vmax.xlane.f32.xlu0 %v1463
  %v1465 = vpop.xlane.xlu0 %1464
  %v1466 = vsel %vm559, %v1275, -inf
  %1467 = vmax.xlane.f32.xlu0 %v1466
  %v1468 = vpop.xlane.xlu0 %1467
  %v1469 = vsel %vm559, %v1278, -inf
  %1470 = vmax.xlane.f32.xlu0 %v1469
  %v1471 = vpop.xlane.xlu0 %1470
  %v1472 = vsel %vm559, %v1281, -inf
  %1473 = vmax.xlane.f32.xlu0 %v1472
  %v1474 = vpop.xlane.xlu0 %1473
  %v1475 = vsel %vm559, %v1284, -inf
  %1476 = vmax.xlane.f32.xlu0 %v1475
  %v1477 = vpop.xlane.xlu0 %1476
  %v1478 = vsel %vm559, %v1287, -inf
  %1479 = vmax.xlane.f32.xlu0 %v1478
  %v1480 = vpop.xlane.xlu0 %1479
  %v1481 = vsel %vm559, %v1290, -inf
  %1482 = vmax.xlane.f32.xlu0 %v1481
  %v1483 = vpop.xlane.xlu0 %1482
  %v1484 = vsel %vm559, %v1293, -inf
  %1485 = vmax.xlane.f32.xlu0 %v1484
  %v1486 = vpop.xlane.xlu0 %1485
  %v1487 = vsel %vm559, %v1296, -inf
  %1488 = vmax.xlane.f32.xlu0 %v1487
  %v1489 = vpop.xlane.xlu0 %1488
  %v1490 = vsel %vm559, %v1299, -inf
  %1491 = vmax.xlane.f32.xlu0 %v1490
  %v1492 = vpop.xlane.xlu0 %1491
  %v1493 = vsel %vm559, %v1302, -inf
  %1494 = vmax.xlane.f32.xlu0 %v1493
  %v1495 = vpop.xlane.xlu0 %1494
  %v1496 = vsel %vm559, %v1305, -inf
  %1497 = vmax.xlane.f32.xlu0 %v1496
  %v1498 = vpop.xlane.xlu0 %1497
  %v1499 = vsel %vm559, %v1308, -inf
  %1500 = vmax.xlane.f32.xlu0 %v1499
  %v1501 = vpop.xlane.xlu0 %1500
  %v1502 = vsel %vm559, %v1311, -inf
  %1503 = vmax.xlane.f32.xlu0 %v1502
  %v1504 = vpop.xlane.xlu0 %1503
  %v1505 = vsel %vm559, %v1314, -inf
  %1506 = vmax.xlane.f32.xlu0 %v1505
  %v1507 = vpop.xlane.xlu0 %1506
  %v1508 = vsel %vm559, %v1317, -inf
  %1509 = vmax.xlane.f32.xlu0 %v1508
  %v1510 = vpop.xlane.xlu0 %1509
  %v1511 = vsel %vm559, %v1320, -inf
  %1512 = vmax.xlane.f32.xlu0 %v1511
  %v1513 = vpop.xlane.xlu0 %1512
  %v1514 = vsel %vm559, %v1323, -inf
  %1515 = vmax.xlane.f32.xlu0 %v1514
  %v1516 = vpop.xlane.xlu0 %1515
  %v1517 = vsel %vm559, %v1326, -inf
  %1518 = vmax.xlane.f32.xlu0 %v1517
  %v1519 = vpop.xlane.xlu0 %1518
  %v1520 = vsel %vm559, %v1329, -inf
  %1521 = vmax.xlane.f32.xlu0 %v1520
  %v1522 = vpop.xlane.xlu0 %1521
  %v1523 = vsel %vm559, %v1332, -inf
  %1524 = vmax.xlane.f32.xlu0 %v1523
  %v1525 = vpop.xlane.xlu0 %1524
  %v1526 = vsel %vm559, %v1335, -inf
  %1527 = vmax.xlane.f32.xlu0 %v1526
  %v1528 = vpop.xlane.xlu0 %1527
  %v1529 = vsel %vm559, %v1338, -inf
  %1530 = vmax.xlane.f32.xlu0 %v1529
  %v1531 = vpop.xlane.xlu0 %1530
  %v1532 = vsel %vm559, %v1341, -inf
  %1533 = vmax.xlane.f32.xlu0 %v1532
  %v1534 = vpop.xlane.xlu0 %1533
  %v1535 = vsel %vm559, %v1344, -inf
  %1536 = vmax.xlane.f32.xlu0 %v1535
  %v1537 = vpop.xlane.xlu0 %1536
  %v1538 = vsel %vm559, %v1347, -inf
  %1539 = vmax.xlane.f32.xlu0 %v1538
  %v1540 = vpop.xlane.xlu0 %1539
  %v1541 = vsel %vm559, %v1350, -inf
  %1542 = vmax.xlane.f32.xlu0 %v1541
  %v1543 = vpop.xlane.xlu0 %1542
  %v1544 = vsel %vm559, %v1353, -inf
  %1545 = vmax.xlane.f32.xlu0 %v1544
  %v1546 = vpop.xlane.xlu0 %1545
  %v1547 = vsel %vm559, %v1356, -inf
  %1548 = vmax.xlane.f32.xlu0 %v1547
  %v1549 = vpop.xlane.xlu0 %1548
  %v1550 = vsel %vm559, %v1359, -inf
  %1551 = vmax.xlane.f32.xlu0 %v1550
  %v1552 = vpop.xlane.xlu0 %1551
  %v1553 = vsel %vm559, %v1362, -inf
  %1554 = vmax.xlane.f32.xlu0 %v1553
  %v1555 = vpop.xlane.xlu0 %1554
  %v1556 = vsel %vm559, %v1365, -inf
  %1557 = vmax.xlane.f32.xlu0 %v1556
  %v1558 = vpop.xlane.xlu0 %1557
  %v1559 = vsel %vm559, %v1368, -inf
  %1560 = vmax.xlane.f32.xlu0 %v1559
  %v1561 = vpop.xlane.xlu0 %1560
  %v1562 = vsel %vm559, %v1371, -inf
  %1563 = vmax.xlane.f32.xlu0 %v1562
  %v1564 = vpop.xlane.xlu0 %1563
  %v1565 = vsel %vm559, %v1374, -inf
  %1566 = vmax.xlane.f32.xlu0 %v1565
  %v1567 = vpop.xlane.xlu0 %1566
  %v1568 = vsel %vm559, %v1377, -inf
  %1569 = vmax.xlane.f32.xlu0 %v1568
  %v1570 = vpop.xlane.xlu0 %1569
  %v1571 = vsel %vm559, %v1380, -inf
  %1572 = vmax.xlane.f32.xlu0 %v1571
  %v1573 = vpop.xlane.xlu0 %1572
  %v1574 = vsel %vm559, %v1383, -inf
  %1575 = vmax.xlane.f32.xlu0 %v1574
  %v1576 = vpop.xlane.xlu0 %1575
  %v1577 = vsel %vm559, %v1386, -inf
  %1578 = vmax.xlane.f32.xlu0 %v1577
  %v1579 = vpop.xlane.xlu0 %1578
  %v1580 = vsel %vm559, %v1389, -inf
  %1581 = vmax.xlane.f32.xlu0 %v1580
  %v1582 = vpop.xlane.xlu0 %1581
  %v1583 = vsel %vm559, %v1392, -inf
  %1584 = vmax.xlane.f32.xlu0 %v1583
  %v1585 = vpop.xlane.xlu0 %1584
  %v1586 = vsel %vm559, %v1395, -inf
  %1587 = vmax.xlane.f32.xlu0 %v1586
  %v1588 = vpop.xlane.xlu0 %1587
  %v1589 = vsel %vm559, %v1398, -inf
  %1590 = vmax.xlane.f32.xlu0 %v1589
  %v1591 = vpop.xlane.xlu0 %1590
  %v1592 = vsel %vm559, %v1401, -inf
  %1593 = vmax.xlane.f32.xlu0 %v1592
  %v1594 = vpop.xlane.xlu0 %1593
  %v1595 = vsel %vm559, %v1404, -inf
  %1596 = vmax.xlane.f32.xlu0 %v1595
  %v1597 = vpop.xlane.xlu0 %1596
  %v1598 = vsel %vm559, %v1407, -inf
  %1599 = vmax.xlane.f32.xlu0 %v1598
  %v1600 = vpop.xlane.xlu0 %1599
  %v1601 = vsel %vm559, %v1410, -inf
  %1602 = vmax.xlane.f32.xlu0 %v1601
  %v1603 = vpop.xlane.xlu0 %1602
  %v1604 = vsel %vm559, %v1413, -inf
  %1605 = vmax.xlane.f32.xlu0 %v1604
  %v1606 = vpop.xlane.xlu0 %1605
  %v1607 = vsel %vm559, %v1416, -inf
  %1608 = vmax.xlane.f32.xlu0 %v1607
  %v1609 = vpop.xlane.xlu0 %1608
  %v1610 = vsel %vm559, %v1419, -inf
  %1611 = vmax.xlane.f32.xlu0 %v1610
  %v1612 = vpop.xlane.xlu0 %1611
  %v1613 = vsel %vm559, %v1422, -inf
  %1614 = vmax.xlane.f32.xlu0 %v1613
  %v1615 = vpop.xlane.xlu0 %1614
  %v1616 = vsel %vm559, %v1425, -inf
  %1617 = vmax.xlane.f32.xlu0 %v1616
  %v1618 = vpop.xlane.xlu0 %1617
  %v1619 = vsub.f32 %v1236, %v1429
  %v1620 = vsub.f32 %v1239, %v1432
  %v1621 = vsub.f32 %v1242, %v1435
  %v1622 = vsub.f32 %v1245, %v1438
  %v1623 = vsub.f32 %v1248, %v1441
  %v1624 = vsub.f32 %v1251, %v1444
  %v1625 = vsub.f32 %v1254, %v1447
  %v1626 = vsub.f32 %v1257, %v1450
  %v1627 = vsub.f32 %v1260, %v1453
  %v1628 = vsub.f32 %v1263, %v1456
  %v1629 = vsub.f32 %v1266, %v1459
  %v1630 = vsub.f32 %v1269, %v1462
  %v1631 = vsub.f32 %v1272, %v1465
  %v1632 = vsub.f32 %v1275, %v1468
  %v1633 = vsub.f32 %v1278, %v1471
  %v1634 = vsub.f32 %v1281, %v1474
  %v1635 = vsub.f32 %v1284, %v1477
  %v1636 = vsub.f32 %v1287, %v1480
  %v1637 = vsub.f32 %v1290, %v1483
  %v1638 = vsub.f32 %v1293, %v1486
  %v1639 = vsub.f32 %v1296, %v1489
  %v1640 = vsub.f32 %v1299, %v1492
  %v1641 = vsub.f32 %v1302, %v1495
  %v1642 = vsub.f32 %v1305, %v1498
  %v1643 = vsub.f32 %v1308, %v1501
  %v1644 = vsub.f32 %v1311, %v1504
  %v1645 = vsub.f32 %v1314, %v1507
  %v1646 = vsub.f32 %v1317, %v1510
  %v1647 = vsub.f32 %v1320, %v1513
  %v1648 = vsub.f32 %v1323, %v1516
  %v1649 = vsub.f32 %v1326, %v1519
  %v1650 = vsub.f32 %v1329, %v1522
  %v1651 = vsub.f32 %v1332, %v1525
  %v1652 = vsub.f32 %v1335, %v1528
  %v1653 = vsub.f32 %v1338, %v1531
  %v1654 = vsub.f32 %v1341, %v1534
  %v1655 = vsub.f32 %v1344, %v1537
  %v1656 = vsub.f32 %v1347, %v1540
  %v1657 = vsub.f32 %v1350, %v1543
  %v1658 = vsub.f32 %v1353, %v1546
  %v1659 = vsub.f32 %v1356, %v1549
  %v1660 = vsub.f32 %v1359, %v1552
  %v1661 = vsub.f32 %v1362, %v1555
  %v1662 = vsub.f32 %v1365, %v1558
  %v1663 = vsub.f32 %v1368, %v1561
  %v1664 = vsub.f32 %v1371, %v1564
  %v1665 = vsub.f32 %v1374, %v1567
  %v1666 = vsub.f32 %v1377, %v1570
  %v1667 = vsub.f32 %v1380, %v1573
  %v1668 = vsub.f32 %v1383, %v1576
  %v1669 = vsub.f32 %v1386, %v1579
  %v1670 = vsub.f32 %v1389, %v1582
  %v1671 = vsub.f32 %v1392, %v1585
  %v1672 = vsub.f32 %v1395, %v1588
  %v1673 = vsub.f32 %v1398, %v1591
  %v1674 = vsub.f32 %v1401, %v1594
  %v1675 = vsub.f32 %v1404, %v1597
  %v1676 = vsub.f32 %v1407, %v1600
  %v1677 = vsub.f32 %v1410, %v1603
  %v1678 = vsub.f32 %v1413, %v1606
  %v1679 = vsub.f32 %v1416, %v1609
  %v1680 = vsub.f32 %v1419, %v1612
  %v1681 = vsub.f32 %v1422, %v1615
  %v1682 = vsub.f32 %v1425, %v1618
  %v1683 = vmul.f32 %v1619, 1.442695
  %v1684 = vpow.pop %v1683
  %v1685 = vmul.f32 %v1620, 1.442695
  %v1686 = vpow.pop %v1685
  %v1687 = vmul.f32 %v1621, 1.442695
  %v1688 = vpow.pop %v1687
  %v1689 = vmul.f32 %v1622, 1.442695
  %v1690 = vpow.pop %v1689
  %v1691 = vmul.f32 %v1623, 1.442695
  %v1692 = vpow.pop %v1691
  %v1693 = vmul.f32 %v1624, 1.442695
  %v1694 = vpow.pop %v1693
  %v1695 = vmul.f32 %v1625, 1.442695
  %v1696 = vpow.pop %v1695
  %v1697 = vmul.f32 %v1626, 1.442695
  %v1698 = vpow.pop %v1697
  %v1699 = vmul.f32 %v1627, 1.442695
  %v1700 = vpow.pop %v1699
  %v1701 = vmul.f32 %v1628, 1.442695
  %v1702 = vpow.pop %v1701
  %v1703 = vmul.f32 %v1629, 1.442695
  %v1704 = vpow.pop %v1703
  %v1705 = vmul.f32 %v1630, 1.442695
  %v1706 = vpow.pop %v1705
  %v1707 = vmul.f32 %v1631, 1.442695
  %v1708 = vpow.pop %v1707
  %v1709 = vmul.f32 %v1632, 1.442695
  %v1710 = vpow.pop %v1709
  %v1711 = vmul.f32 %v1633, 1.442695
  %v1712 = vpow.pop %v1711
  %v1713 = vmul.f32 %v1634, 1.442695
  %v1714 = vpow.pop %v1713
  %v1715 = vmul.f32 %v1635, 1.442695
  %v1716 = vpow.pop %v1715
  %v1717 = vmul.f32 %v1636, 1.442695
  %v1718 = vpow.pop %v1717
  %v1719 = vmul.f32 %v1637, 1.442695
  %v1720 = vpow.pop %v1719
  %v1721 = vmul.f32 %v1638, 1.442695
  %v1722 = vpow.pop %v1721
  %v1723 = vmul.f32 %v1639, 1.442695
  %v1724 = vpow.pop %v1723
  %v1725 = vmul.f32 %v1640, 1.442695
  %v1726 = vpow.pop %v1725
  %v1727 = vmul.f32 %v1641, 1.442695
  %v1728 = vpow.pop %v1727
  %v1729 = vmul.f32 %v1642, 1.442695
  %v1730 = vpow.pop %v1729
  %v1731 = vmul.f32 %v1643, 1.442695
  %v1732 = vpow.pop %v1731
  %v1733 = vmul.f32 %v1644, 1.442695
  %v1734 = vpow.pop %v1733
  %v1735 = vmul.f32 %v1645, 1.442695
  %v1736 = vpow.pop %v1735
  %v1737 = vmul.f32 %v1646, 1.442695
  %v1738 = vpow.pop %v1737
  %v1739 = vmul.f32 %v1647, 1.442695
  %v1740 = vpow.pop %v1739
  %v1741 = vmul.f32 %v1648, 1.442695
  %v1742 = vpow.pop %v1741
  %v1743 = vmul.f32 %v1649, 1.442695
  %v1744 = vpow.pop %v1743
  %v1745 = vmul.f32 %v1650, 1.442695
  %v1746 = vpow.pop %v1745
  %v1747 = vmul.f32 %v1651, 1.442695
  %v1748 = vpow.pop %v1747
  %v1749 = vmul.f32 %v1652, 1.442695
  %v1750 = vpow.pop %v1749
  %v1751 = vmul.f32 %v1653, 1.442695
  %v1752 = vpow.pop %v1751
  %v1753 = vmul.f32 %v1654, 1.442695
  %v1754 = vpow.pop %v1753
  %v1755 = vmul.f32 %v1655, 1.442695
  %v1756 = vpow.pop %v1755
  %v1757 = vmul.f32 %v1656, 1.442695
  %v1758 = vpow.pop %v1757
  %v1759 = vmul.f32 %v1657, 1.442695
  %v1760 = vpow.pop %v1759
  %v1761 = vmul.f32 %v1658, 1.442695
  %v1762 = vpow.pop %v1761
  %v1763 = vmul.f32 %v1659, 1.442695
  %v1764 = vpow.pop %v1763
  %v1765 = vmul.f32 %v1660, 1.442695
  %v1766 = vpow.pop %v1765
  %v1767 = vmul.f32 %v1661, 1.442695
  %v1768 = vpow.pop %v1767
  %v1769 = vmul.f32 %v1662, 1.442695
  %v1770 = vpow.pop %v1769
  %v1771 = vmul.f32 %v1663, 1.442695
  %v1772 = vpow.pop %v1771
  %v1773 = vmul.f32 %v1664, 1.442695
  %v1774 = vpow.pop %v1773
  %v1775 = vmul.f32 %v1665, 1.442695
  %v1776 = vpow.pop %v1775
  %v1777 = vmul.f32 %v1666, 1.442695
  %v1778 = vpow.pop %v1777
  %v1779 = vmul.f32 %v1667, 1.442695
  %v1780 = vpow.pop %v1779
  %v1781 = vmul.f32 %v1668, 1.442695
  %v1782 = vpow.pop %v1781
  %v1783 = vmul.f32 %v1669, 1.442695
  %v1784 = vpow.pop %v1783
  %v1785 = vmul.f32 %v1670, 1.442695
  %v1786 = vpow.pop %v1785
  %v1787 = vmul.f32 %v1671, 1.442695
  %v1788 = vpow.pop %v1787
  %v1789 = vmul.f32 %v1672, 1.442695
  %v1790 = vpow.pop %v1789
  %v1791 = vmul.f32 %v1673, 1.442695
  %v1792 = vpow.pop %v1791
  %v1793 = vmul.f32 %v1674, 1.442695
  %v1794 = vpow.pop %v1793
  %v1795 = vmul.f32 %v1675, 1.442695
  %v1796 = vpow.pop %v1795
  %v1797 = vmul.f32 %v1676, 1.442695
  %v1798 = vpow.pop %v1797
  %v1799 = vmul.f32 %v1677, 1.442695
  %v1800 = vpow.pop %v1799
  %v1801 = vmul.f32 %v1678, 1.442695
  %v1802 = vpow.pop %v1801
  %v1803 = vmul.f32 %v1679, 1.442695
  %v1804 = vpow.pop %v1803
  %v1805 = vmul.f32 %v1680, 1.442695
  %v1806 = vpow.pop %v1805
  %v1807 = vmul.f32 %v1681, 1.442695
  %v1808 = vpow.pop %v1807
  %v1809 = vmul.f32 %v1682, 1.442695
  %v1810 = vpow.pop %v1809
  %v1811 = vsel %vm559, %v1684, 0.0
  %1812 = vadd.xlane.f32.xlu0 %v1811
  %v1813 = vpop.xlane.xlu0 %1812
  %v1814 = vsel %vm559, %v1686, 0.0
  %1815 = vadd.xlane.f32.xlu0 %v1814
  %v1816 = vpop.xlane.xlu0 %1815
  %v1817 = vsel %vm559, %v1688, 0.0
  %1818 = vadd.xlane.f32.xlu0 %v1817
  %v1819 = vpop.xlane.xlu0 %1818
  %v1820 = vsel %vm559, %v1690, 0.0
  %1821 = vadd.xlane.f32.xlu0 %v1820
  %v1822 = vpop.xlane.xlu0 %1821
  %v1823 = vsel %vm559, %v1692, 0.0
  %1824 = vadd.xlane.f32.xlu0 %v1823
  %v1825 = vpop.xlane.xlu0 %1824
  %v1826 = vsel %vm559, %v1694, 0.0
  %1827 = vadd.xlane.f32.xlu0 %v1826
  %v1828 = vpop.xlane.xlu0 %1827
  %v1829 = vsel %vm559, %v1696, 0.0
  %1830 = vadd.xlane.f32.xlu0 %v1829
  %v1831 = vpop.xlane.xlu0 %1830
  %v1832 = vsel %vm559, %v1698, 0.0
  %1833 = vadd.xlane.f32.xlu0 %v1832
  %v1834 = vpop.xlane.xlu0 %1833
  %v1835 = vsel %vm559, %v1700, 0.0
  %1836 = vadd.xlane.f32.xlu0 %v1835
  %v1837 = vpop.xlane.xlu0 %1836
  %v1838 = vsel %vm559, %v1702, 0.0
  %1839 = vadd.xlane.f32.xlu0 %v1838
  %v1840 = vpop.xlane.xlu0 %1839
  %v1841 = vsel %vm559, %v1704, 0.0
  %1842 = vadd.xlane.f32.xlu0 %v1841
  %v1843 = vpop.xlane.xlu0 %1842
  %v1844 = vsel %vm559, %v1706, 0.0
  %1845 = vadd.xlane.f32.xlu0 %v1844
  %v1846 = vpop.xlane.xlu0 %1845
  %v1847 = vsel %vm559, %v1708, 0.0
  %1848 = vadd.xlane.f32.xlu0 %v1847
  %v1849 = vpop.xlane.xlu0 %1848
  %v1850 = vsel %vm559, %v1710, 0.0
  %1851 = vadd.xlane.f32.xlu0 %v1850
  %v1852 = vpop.xlane.xlu0 %1851
  %v1853 = vsel %vm559, %v1712, 0.0
  %1854 = vadd.xlane.f32.xlu0 %v1853
  %v1855 = vpop.xlane.xlu0 %1854
  %v1856 = vsel %vm559, %v1714, 0.0
  %1857 = vadd.xlane.f32.xlu0 %v1856
  %v1858 = vpop.xlane.xlu0 %1857
  %v1859 = vsel %vm559, %v1716, 0.0
  %1860 = vadd.xlane.f32.xlu0 %v1859
  %v1861 = vpop.xlane.xlu0 %1860
  %v1862 = vsel %vm559, %v1718, 0.0
  %1863 = vadd.xlane.f32.xlu0 %v1862
  %v1864 = vpop.xlane.xlu0 %1863
  %v1865 = vsel %vm559, %v1720, 0.0
  %1866 = vadd.xlane.f32.xlu0 %v1865
  %v1867 = vpop.xlane.xlu0 %1866
  %v1868 = vsel %vm559, %v1722, 0.0
  %1869 = vadd.xlane.f32.xlu0 %v1868
  %v1870 = vpop.xlane.xlu0 %1869
  %v1871 = vsel %vm559, %v1724, 0.0
  %1872 = vadd.xlane.f32.xlu0 %v1871
  %v1873 = vpop.xlane.xlu0 %1872
  %v1874 = vsel %vm559, %v1726, 0.0
  %1875 = vadd.xlane.f32.xlu0 %v1874
  %v1876 = vpop.xlane.xlu0 %1875
  %v1877 = vsel %vm559, %v1728, 0.0
  %1878 = vadd.xlane.f32.xlu0 %v1877
  %v1879 = vpop.xlane.xlu0 %1878
  %v1880 = vsel %vm559, %v1730, 0.0
  %1881 = vadd.xlane.f32.xlu0 %v1880
  %v1882 = vpop.xlane.xlu0 %1881
  %v1883 = vsel %vm559, %v1732, 0.0
  %1884 = vadd.xlane.f32.xlu0 %v1883
  %v1885 = vpop.xlane.xlu0 %1884
  %v1886 = vsel %vm559, %v1734, 0.0
  %1887 = vadd.xlane.f32.xlu0 %v1886
  %v1888 = vpop.xlane.xlu0 %1887
  %v1889 = vsel %vm559, %v1736, 0.0
  %1890 = vadd.xlane.f32.xlu0 %v1889
  %v1891 = vpop.xlane.xlu0 %1890
  %v1892 = vsel %vm559, %v1738, 0.0
  %1893 = vadd.xlane.f32.xlu0 %v1892
  %v1894 = vpop.xlane.xlu0 %1893
  %v1895 = vsel %vm559, %v1740, 0.0
  %1896 = vadd.xlane.f32.xlu0 %v1895
  %v1897 = vpop.xlane.xlu0 %1896
  %v1898 = vsel %vm559, %v1742, 0.0
  %1899 = vadd.xlane.f32.xlu0 %v1898
  %v1900 = vpop.xlane.xlu0 %1899
  %v1901 = vsel %vm559, %v1744, 0.0
  %1902 = vadd.xlane.f32.xlu0 %v1901
  %v1903 = vpop.xlane.xlu0 %1902
  %v1904 = vsel %vm559, %v1746, 0.0
  %1905 = vadd.xlane.f32.xlu0 %v1904
  %v1906 = vpop.xlane.xlu0 %1905
  %v1907 = vsel %vm559, %v1748, 0.0
  %1908 = vadd.xlane.f32.xlu0 %v1907
  %v1909 = vpop.xlane.xlu0 %1908
  %v1910 = vsel %vm559, %v1750, 0.0
  %1911 = vadd.xlane.f32.xlu0 %v1910
  %v1912 = vpop.xlane.xlu0 %1911
  %v1913 = vsel %vm559, %v1752, 0.0
  %1914 = vadd.xlane.f32.xlu0 %v1913
  %v1915 = vpop.xlane.xlu0 %1914
  %v1916 = vsel %vm559, %v1754, 0.0
  %1917 = vadd.xlane.f32.xlu0 %v1916
  %v1918 = vpop.xlane.xlu0 %1917
  %v1919 = vsel %vm559, %v1756, 0.0
  %1920 = vadd.xlane.f32.xlu0 %v1919
  %v1921 = vpop.xlane.xlu0 %1920
  %v1922 = vsel %vm559, %v1758, 0.0
  %1923 = vadd.xlane.f32.xlu0 %v1922
  %v1924 = vpop.xlane.xlu0 %1923
  %v1925 = vsel %vm559, %v1760, 0.0
  %1926 = vadd.xlane.f32.xlu0 %v1925
  %v1927 = vpop.xlane.xlu0 %1926
  %v1928 = vsel %vm559, %v1762, 0.0
  %1929 = vadd.xlane.f32.xlu0 %v1928
  %v1930 = vpop.xlane.xlu0 %1929
  %v1931 = vsel %vm559, %v1764, 0.0
  %1932 = vadd.xlane.f32.xlu0 %v1931
  %v1933 = vpop.xlane.xlu0 %1932
  %v1934 = vsel %vm559, %v1766, 0.0
  %1935 = vadd.xlane.f32.xlu0 %v1934
  %v1936 = vpop.xlane.xlu0 %1935
  %v1937 = vsel %vm559, %v1768, 0.0
  %1938 = vadd.xlane.f32.xlu0 %v1937
  %v1939 = vpop.xlane.xlu0 %1938
  %v1940 = vsel %vm559, %v1770, 0.0
  %1941 = vadd.xlane.f32.xlu0 %v1940
  %v1942 = vpop.xlane.xlu0 %1941
  %v1943 = vsel %vm559, %v1772, 0.0
  %1944 = vadd.xlane.f32.xlu0 %v1943
  %v1945 = vpop.xlane.xlu0 %1944
  %v1946 = vsel %vm559, %v1774, 0.0
  %1947 = vadd.xlane.f32.xlu0 %v1946
  %v1948 = vpop.xlane.xlu0 %1947
  %v1949 = vsel %vm559, %v1776, 0.0
  %1950 = vadd.xlane.f32.xlu0 %v1949
  %v1951 = vpop.xlane.xlu0 %1950
  %v1952 = vsel %vm559, %v1778, 0.0
  %1953 = vadd.xlane.f32.xlu0 %v1952
  %v1954 = vpop.xlane.xlu0 %1953
  %v1955 = vsel %vm559, %v1780, 0.0
  %1956 = vadd.xlane.f32.xlu0 %v1955
  %v1957 = vpop.xlane.xlu0 %1956
  %v1958 = vsel %vm559, %v1782, 0.0
  %1959 = vadd.xlane.f32.xlu0 %v1958
  %v1960 = vpop.xlane.xlu0 %1959
  %v1961 = vsel %vm559, %v1784, 0.0
  %1962 = vadd.xlane.f32.xlu0 %v1961
  %v1963 = vpop.xlane.xlu0 %1962
  %v1964 = vsel %vm559, %v1786, 0.0
  %1965 = vadd.xlane.f32.xlu0 %v1964
  %v1966 = vpop.xlane.xlu0 %1965
  %v1967 = vsel %vm559, %v1788, 0.0
  %1968 = vadd.xlane.f32.xlu0 %v1967
  %v1969 = vpop.xlane.xlu0 %1968
  %v1970 = vsel %vm559, %v1790, 0.0
  %1971 = vadd.xlane.f32.xlu0 %v1970
  %v1972 = vpop.xlane.xlu0 %1971
  %v1973 = vsel %vm559, %v1792, 0.0
  %1974 = vadd.xlane.f32.xlu0 %v1973
  %v1975 = vpop.xlane.xlu0 %1974
  %v1976 = vsel %vm559, %v1794, 0.0
  %1977 = vadd.xlane.f32.xlu0 %v1976
  %v1978 = vpop.xlane.xlu0 %1977
  %v1979 = vsel %vm559, %v1796, 0.0
  %1980 = vadd.xlane.f32.xlu0 %v1979
  %v1981 = vpop.xlane.xlu0 %1980
  %v1982 = vsel %vm559, %v1798, 0.0
  %1983 = vadd.xlane.f32.xlu0 %v1982
  %v1984 = vpop.xlane.xlu0 %1983
  %v1985 = vsel %vm559, %v1800, 0.0
  %1986 = vadd.xlane.f32.xlu0 %v1985
  %v1987 = vpop.xlane.xlu0 %1986
  %v1988 = vsel %vm559, %v1802, 0.0
  %1989 = vadd.xlane.f32.xlu0 %v1988
  %v1990 = vpop.xlane.xlu0 %1989
  %v1991 = vsel %vm559, %v1804, 0.0
  %1992 = vadd.xlane.f32.xlu0 %v1991
  %v1993 = vpop.xlane.xlu0 %1992
  %v1994 = vsel %vm559, %v1806, 0.0
  %1995 = vadd.xlane.f32.xlu0 %v1994
  %v1996 = vpop.xlane.xlu0 %1995
  %v1997 = vsel %vm559, %v1808, 0.0
  %1998 = vadd.xlane.f32.xlu0 %v1997
  %v1999 = vpop.xlane.xlu0 %1998
  %v2000 = vsel %vm559, %v1810, 0.0
  %2001 = vadd.xlane.f32.xlu0 %v2000
  %v2002 = vpop.xlane.xlu0 %2001
  %v2003 = vrcp.pop %v1813
  %v2004 = vmul.f32 %v1813, %v2003
  %v2005 = vsub.f32 1.0, %v2004
  %v2006 = vmul.f32 %v2003, %v2005
  %v2007 = vadd.f32 %v2003, %v2006
  %vm2008 = vweird.f32 %v1813
  %vm2009 = vweird.f32 %v2003
  %vm2010 = vmor %vm2008, %vm2009
  %v2011 = vsel %vm2010, %v2003, %v2007
  %v2012 = vand.u32 2147483647, %v1813
  %vm2013 = vcmp.eq.f32.partialorder %v2012, 8.507059e+37
  %v2014 = vand.u32 %v1813, 2147483648
  %v2015 = vor.u32 1.1754944e-38, %v2014
  %v2016 = vsel %vm2013, %v2015, %v2011
  %v2017 = vmul.f32 %v1684, %v2016
  %v2018 = vrcp.pop %v1816
  %v2019 = vmul.f32 %v1816, %v2018
  %v2020 = vsub.f32 1.0, %v2019
  %v2021 = vmul.f32 %v2018, %v2020
  %v2022 = vadd.f32 %v2018, %v2021
  %vm2023 = vweird.f32 %v1816
  %vm2024 = vweird.f32 %v2018
  %vm2025 = vmor %vm2023, %vm2024
  %v2026 = vsel %vm2025, %v2018, %v2022
  %v2027 = vand.u32 2147483647, %v1816
  %vm2028 = vcmp.eq.f32.partialorder %v2027, 8.507059e+37
  %v2029 = vand.u32 %v1816, 2147483648
  %v2030 = vor.u32 1.1754944e-38, %v2029
  %v2031 = vsel %vm2028, %v2030, %v2026
  %v2032 = vmul.f32 %v1686, %v2031
  %v2033 = vrcp.pop %v1819
  %v2034 = vmul.f32 %v1819, %v2033
  %v2035 = vsub.f32 1.0, %v2034
  %v2036 = vmul.f32 %v2033, %v2035
  %v2037 = vadd.f32 %v2033, %v2036
  %vm2038 = vweird.f32 %v1819
  %vm2039 = vweird.f32 %v2033
  %vm2040 = vmor %vm2038, %vm2039
  %v2041 = vsel %vm2040, %v2033, %v2037
  %v2042 = vand.u32 2147483647, %v1819
  %vm2043 = vcmp.eq.f32.partialorder %v2042, 8.507059e+37
  %v2044 = vand.u32 %v1819, 2147483648
  %v2045 = vor.u32 1.1754944e-38, %v2044
  %v2046 = vsel %vm2043, %v2045, %v2041
  %v2047 = vmul.f32 %v1688, %v2046
  %v2048 = vrcp.pop %v1822
  %v2049 = vmul.f32 %v1822, %v2048
  %v2050 = vsub.f32 1.0, %v2049
  %v2051 = vmul.f32 %v2048, %v2050
  %v2052 = vadd.f32 %v2048, %v2051
  %vm2053 = vweird.f32 %v1822
  %vm2054 = vweird.f32 %v2048
  %vm2055 = vmor %vm2053, %vm2054
  %v2056 = vsel %vm2055, %v2048, %v2052
  %v2057 = vand.u32 2147483647, %v1822
  %vm2058 = vcmp.eq.f32.partialorder %v2057, 8.507059e+37
  %v2059 = vand.u32 %v1822, 2147483648
  %v2060 = vor.u32 1.1754944e-38, %v2059
  %v2061 = vsel %vm2058, %v2060, %v2056
  %v2062 = vmul.f32 %v1690, %v2061
  %v2063 = vrcp.pop %v1825
  %v2064 = vmul.f32 %v1825, %v2063
  %v2065 = vsub.f32 1.0, %v2064
  %v2066 = vmul.f32 %v2063, %v2065
  %v2067 = vadd.f32 %v2063, %v2066
  %vm2068 = vweird.f32 %v1825
  %vm2069 = vweird.f32 %v2063
  %vm2070 = vmor %vm2068, %vm2069
  %v2071 = vsel %vm2070, %v2063, %v2067
  %v2072 = vand.u32 2147483647, %v1825
  %vm2073 = vcmp.eq.f32.partialorder %v2072, 8.507059e+37
  %v2074 = vand.u32 %v1825, 2147483648
  %v2075 = vor.u32 1.1754944e-38, %v2074
  %v2076 = vsel %vm2073, %v2075, %v2071
  %v2077 = vmul.f32 %v1692, %v2076
  %v2078 = vrcp.pop %v1828
  %v2079 = vmul.f32 %v1828, %v2078
  %v2080 = vsub.f32 1.0, %v2079
  %v2081 = vmul.f32 %v2078, %v2080
  %v2082 = vadd.f32 %v2078, %v2081
  %vm2083 = vweird.f32 %v1828
  %vm2084 = vweird.f32 %v2078
  %vm2085 = vmor %vm2083, %vm2084
  %v2086 = vsel %vm2085, %v2078, %v2082
  %v2087 = vand.u32 2147483647, %v1828
  %vm2088 = vcmp.eq.f32.partialorder %v2087, 8.507059e+37
  %v2089 = vand.u32 %v1828, 2147483648
  %v2090 = vor.u32 1.1754944e-38, %v2089
  %v2091 = vsel %vm2088, %v2090, %v2086
  %v2092 = vmul.f32 %v1694, %v2091
  %v2093 = vrcp.pop %v1831
  %v2094 = vmul.f32 %v1831, %v2093
  %v2095 = vsub.f32 1.0, %v2094
  %v2096 = vmul.f32 %v2093, %v2095
  %v2097 = vadd.f32 %v2093, %v2096
  %vm2098 = vweird.f32 %v1831
  %vm2099 = vweird.f32 %v2093
  %vm2100 = vmor %vm2098, %vm2099
  %v2101 = vsel %vm2100, %v2093, %v2097
  %v2102 = vand.u32 2147483647, %v1831
  %vm2103 = vcmp.eq.f32.partialorder %v2102, 8.507059e+37
  %v2104 = vand.u32 %v1831, 2147483648
  %v2105 = vor.u32 1.1754944e-38, %v2104
  %v2106 = vsel %vm2103, %v2105, %v2101
  %v2107 = vmul.f32 %v1696, %v2106
  %v2108 = vrcp.pop %v1834
  %v2109 = vmul.f32 %v1834, %v2108
  %v2110 = vsub.f32 1.0, %v2109
  %v2111 = vmul.f32 %v2108, %v2110
  %v2112 = vadd.f32 %v2108, %v2111
  %vm2113 = vweird.f32 %v1834
  %vm2114 = vweird.f32 %v2108
  %vm2115 = vmor %vm2113, %vm2114
  %v2116 = vsel %vm2115, %v2108, %v2112
  %v2117 = vand.u32 2147483647, %v1834
  %vm2118 = vcmp.eq.f32.partialorder %v2117, 8.507059e+37
  %v2119 = vand.u32 %v1834, 2147483648
  %v2120 = vor.u32 1.1754944e-38, %v2119
  %v2121 = vsel %vm2118, %v2120, %v2116
  %v2122 = vmul.f32 %v1698, %v2121
  %v2123 = vrcp.pop %v1837
  %v2124 = vmul.f32 %v1837, %v2123
  %v2125 = vsub.f32 1.0, %v2124
  %v2126 = vmul.f32 %v2123, %v2125
  %v2127 = vadd.f32 %v2123, %v2126
  %vm2128 = vweird.f32 %v1837
  %vm2129 = vweird.f32 %v2123
  %vm2130 = vmor %vm2128, %vm2129
  %v2131 = vsel %vm2130, %v2123, %v2127
  %v2132 = vand.u32 2147483647, %v1837
  %vm2133 = vcmp.eq.f32.partialorder %v2132, 8.507059e+37
  %v2134 = vand.u32 %v1837, 2147483648
  %v2135 = vor.u32 1.1754944e-38, %v2134
  %v2136 = vsel %vm2133, %v2135, %v2131
  %v2137 = vmul.f32 %v1700, %v2136
  %v2138 = vrcp.pop %v1840
  %v2139 = vmul.f32 %v1840, %v2138
  %v2140 = vsub.f32 1.0, %v2139
  %v2141 = vmul.f32 %v2138, %v2140
  %v2142 = vadd.f32 %v2138, %v2141
  %vm2143 = vweird.f32 %v1840
  %vm2144 = vweird.f32 %v2138
  %vm2145 = vmor %vm2143, %vm2144
  %v2146 = vsel %vm2145, %v2138, %v2142
  %v2147 = vand.u32 2147483647, %v1840
  %vm2148 = vcmp.eq.f32.partialorder %v2147, 8.507059e+37
  %v2149 = vand.u32 %v1840, 2147483648
  %v2150 = vor.u32 1.1754944e-38, %v2149
  %v2151 = vsel %vm2148, %v2150, %v2146
  %v2152 = vmul.f32 %v1702, %v2151
  %v2153 = vrcp.pop %v1843
  %v2154 = vmul.f32 %v1843, %v2153
  %v2155 = vsub.f32 1.0, %v2154
  %v2156 = vmul.f32 %v2153, %v2155
  %v2157 = vadd.f32 %v2153, %v2156
  %vm2158 = vweird.f32 %v1843
  %vm2159 = vweird.f32 %v2153
  %vm2160 = vmor %vm2158, %vm2159
  %v2161 = vsel %vm2160, %v2153, %v2157
  %v2162 = vand.u32 2147483647, %v1843
  %vm2163 = vcmp.eq.f32.partialorder %v2162, 8.507059e+37
  %v2164 = vand.u32 %v1843, 2147483648
  %v2165 = vor.u32 1.1754944e-38, %v2164
  %v2166 = vsel %vm2163, %v2165, %v2161
  %v2167 = vmul.f32 %v1704, %v2166
  %v2168 = vrcp.pop %v1846
  %v2169 = vmul.f32 %v1846, %v2168
  %v2170 = vsub.f32 1.0, %v2169
  %v2171 = vmul.f32 %v2168, %v2170
  %v2172 = vadd.f32 %v2168, %v2171
  %vm2173 = vweird.f32 %v1846
  %vm2174 = vweird.f32 %v2168
  %vm2175 = vmor %vm2173, %vm2174
  %v2176 = vsel %vm2175, %v2168, %v2172
  %v2177 = vand.u32 2147483647, %v1846
  %vm2178 = vcmp.eq.f32.partialorder %v2177, 8.507059e+37
  %v2179 = vand.u32 %v1846, 2147483648
  %v2180 = vor.u32 1.1754944e-38, %v2179
  %v2181 = vsel %vm2178, %v2180, %v2176
  %v2182 = vmul.f32 %v1706, %v2181
  %v2183 = vrcp.pop %v1849
  %v2184 = vmul.f32 %v1849, %v2183
  %v2185 = vsub.f32 1.0, %v2184
  %v2186 = vmul.f32 %v2183, %v2185
  %v2187 = vadd.f32 %v2183, %v2186
  %vm2188 = vweird.f32 %v1849
  %vm2189 = vweird.f32 %v2183
  %vm2190 = vmor %vm2188, %vm2189
  %v2191 = vsel %vm2190, %v2183, %v2187
  %v2192 = vand.u32 2147483647, %v1849
  %vm2193 = vcmp.eq.f32.partialorder %v2192, 8.507059e+37
  %v2194 = vand.u32 %v1849, 2147483648
  %v2195 = vor.u32 1.1754944e-38, %v2194
  %v2196 = vsel %vm2193, %v2195, %v2191
  %v2197 = vmul.f32 %v1708, %v2196
  %v2198 = vrcp.pop %v1852
  %v2199 = vmul.f32 %v1852, %v2198
  %v2200 = vsub.f32 1.0, %v2199
  %v2201 = vmul.f32 %v2198, %v2200
  %v2202 = vadd.f32 %v2198, %v2201
  %vm2203 = vweird.f32 %v1852
  %vm2204 = vweird.f32 %v2198
  %vm2205 = vmor %vm2203, %vm2204
  %v2206 = vsel %vm2205, %v2198, %v2202
  %v2207 = vand.u32 2147483647, %v1852
  %vm2208 = vcmp.eq.f32.partialorder %v2207, 8.507059e+37
  %v2209 = vand.u32 %v1852, 2147483648
  %v2210 = vor.u32 1.1754944e-38, %v2209
  %v2211 = vsel %vm2208, %v2210, %v2206
  %v2212 = vmul.f32 %v1710, %v2211
  %v2213 = vrcp.pop %v1855
  %v2214 = vmul.f32 %v1855, %v2213
  %v2215 = vsub.f32 1.0, %v2214
  %v2216 = vmul.f32 %v2213, %v2215
  %v2217 = vadd.f32 %v2213, %v2216
  %vm2218 = vweird.f32 %v1855
  %vm2219 = vweird.f32 %v2213
  %vm2220 = vmor %vm2218, %vm2219
  %v2221 = vsel %vm2220, %v2213, %v2217
  %v2222 = vand.u32 2147483647, %v1855
  %vm2223 = vcmp.eq.f32.partialorder %v2222, 8.507059e+37
  %v2224 = vand.u32 %v1855, 2147483648
  %v2225 = vor.u32 1.1754944e-38, %v2224
  %v2226 = vsel %vm2223, %v2225, %v2221
  %v2227 = vmul.f32 %v1712, %v2226
  %v2228 = vrcp.pop %v1858
  %v2229 = vmul.f32 %v1858, %v2228
  %v2230 = vsub.f32 1.0, %v2229
  %v2231 = vmul.f32 %v2228, %v2230
  %v2232 = vadd.f32 %v2228, %v2231
  %vm2233 = vweird.f32 %v1858
  %vm2234 = vweird.f32 %v2228
  %vm2235 = vmor %vm2233, %vm2234
  %v2236 = vsel %vm2235, %v2228, %v2232
  %v2237 = vand.u32 2147483647, %v1858
  %vm2238 = vcmp.eq.f32.partialorder %v2237, 8.507059e+37
  %v2239 = vand.u32 %v1858, 2147483648
  %v2240 = vor.u32 1.1754944e-38, %v2239
  %v2241 = vsel %vm2238, %v2240, %v2236
  %v2242 = vmul.f32 %v1714, %v2241
  %v2243 = vrcp.pop %v1861
  %v2244 = vmul.f32 %v1861, %v2243
  %v2245 = vsub.f32 1.0, %v2244
  %v2246 = vmul.f32 %v2243, %v2245
  %v2247 = vadd.f32 %v2243, %v2246
  %vm2248 = vweird.f32 %v1861
  %vm2249 = vweird.f32 %v2243
  %vm2250 = vmor %vm2248, %vm2249
  %v2251 = vsel %vm2250, %v2243, %v2247
  %v2252 = vand.u32 2147483647, %v1861
  %vm2253 = vcmp.eq.f32.partialorder %v2252, 8.507059e+37
  %v2254 = vand.u32 %v1861, 2147483648
  %v2255 = vor.u32 1.1754944e-38, %v2254
  %v2256 = vsel %vm2253, %v2255, %v2251
  %v2257 = vmul.f32 %v1716, %v2256
  %v2258 = vrcp.pop %v1864
  %v2259 = vmul.f32 %v1864, %v2258
  %v2260 = vsub.f32 1.0, %v2259
  %v2261 = vmul.f32 %v2258, %v2260
  %v2262 = vadd.f32 %v2258, %v2261
  %vm2263 = vweird.f32 %v1864
  %vm2264 = vweird.f32 %v2258
  %vm2265 = vmor %vm2263, %vm2264
  %v2266 = vsel %vm2265, %v2258, %v2262
  %v2267 = vand.u32 2147483647, %v1864
  %vm2268 = vcmp.eq.f32.partialorder %v2267, 8.507059e+37
  %v2269 = vand.u32 %v1864, 2147483648
  %v2270 = vor.u32 1.1754944e-38, %v2269
  %v2271 = vsel %vm2268, %v2270, %v2266
  %v2272 = vmul.f32 %v1718, %v2271
  %v2273 = vrcp.pop %v1867
  %v2274 = vmul.f32 %v1867, %v2273
  %v2275 = vsub.f32 1.0, %v2274
  %v2276 = vmul.f32 %v2273, %v2275
  %v2277 = vadd.f32 %v2273, %v2276
  %vm2278 = vweird.f32 %v1867
  %vm2279 = vweird.f32 %v2273
  %vm2280 = vmor %vm2278, %vm2279
  %v2281 = vsel %vm2280, %v2273, %v2277
  %v2282 = vand.u32 2147483647, %v1867
  %vm2283 = vcmp.eq.f32.partialorder %v2282, 8.507059e+37
  %v2284 = vand.u32 %v1867, 2147483648
  %v2285 = vor.u32 1.1754944e-38, %v2284
  %v2286 = vsel %vm2283, %v2285, %v2281
  %v2287 = vmul.f32 %v1720, %v2286
  %v2288 = vrcp.pop %v1870
  %v2289 = vmul.f32 %v1870, %v2288
  %v2290 = vsub.f32 1.0, %v2289
  %v2291 = vmul.f32 %v2288, %v2290
  %v2292 = vadd.f32 %v2288, %v2291
  %vm2293 = vweird.f32 %v1870
  %vm2294 = vweird.f32 %v2288
  %vm2295 = vmor %vm2293, %vm2294
  %v2296 = vsel %vm2295, %v2288, %v2292
  %v2297 = vand.u32 2147483647, %v1870
  %vm2298 = vcmp.eq.f32.partialorder %v2297, 8.507059e+37
  %v2299 = vand.u32 %v1870, 2147483648
  %v2300 = vor.u32 1.1754944e-38, %v2299
  %v2301 = vsel %vm2298, %v2300, %v2296
  %v2302 = vmul.f32 %v1722, %v2301
  %v2303 = vrcp.pop %v1873
  %v2304 = vmul.f32 %v1873, %v2303
  %v2305 = vsub.f32 1.0, %v2304
  %v2306 = vmul.f32 %v2303, %v2305
  %v2307 = vadd.f32 %v2303, %v2306
  %vm2308 = vweird.f32 %v1873
  %vm2309 = vweird.f32 %v2303
  %vm2310 = vmor %vm2308, %vm2309
  %v2311 = vsel %vm2310, %v2303, %v2307
  %v2312 = vand.u32 2147483647, %v1873
  %vm2313 = vcmp.eq.f32.partialorder %v2312, 8.507059e+37
  %v2314 = vand.u32 %v1873, 2147483648
  %v2315 = vor.u32 1.1754944e-38, %v2314
  %v2316 = vsel %vm2313, %v2315, %v2311
  %v2317 = vmul.f32 %v1724, %v2316
  %v2318 = vrcp.pop %v1876
  %v2319 = vmul.f32 %v1876, %v2318
  %v2320 = vsub.f32 1.0, %v2319
  %v2321 = vmul.f32 %v2318, %v2320
  %v2322 = vadd.f32 %v2318, %v2321
  %vm2323 = vweird.f32 %v1876
  %vm2324 = vweird.f32 %v2318
  %vm2325 = vmor %vm2323, %vm2324
  %v2326 = vsel %vm2325, %v2318, %v2322
  %v2327 = vand.u32 2147483647, %v1876
  %vm2328 = vcmp.eq.f32.partialorder %v2327, 8.507059e+37
  %v2329 = vand.u32 %v1876, 2147483648
  %v2330 = vor.u32 1.1754944e-38, %v2329
  %v2331 = vsel %vm2328, %v2330, %v2326
  %v2332 = vmul.f32 %v1726, %v2331
  %v2333 = vrcp.pop %v1879
  %v2334 = vmul.f32 %v1879, %v2333
  %v2335 = vsub.f32 1.0, %v2334
  %v2336 = vmul.f32 %v2333, %v2335
  %v2337 = vadd.f32 %v2333, %v2336
  %vm2338 = vweird.f32 %v1879
  %vm2339 = vweird.f32 %v2333
  %vm2340 = vmor %vm2338, %vm2339
  %v2341 = vsel %vm2340, %v2333, %v2337
  %v2342 = vand.u32 2147483647, %v1879
  %vm2343 = vcmp.eq.f32.partialorder %v2342, 8.507059e+37
  %v2344 = vand.u32 %v1879, 2147483648
  %v2345 = vor.u32 1.1754944e-38, %v2344
  %v2346 = vsel %vm2343, %v2345, %v2341
  %v2347 = vmul.f32 %v1728, %v2346
  %v2348 = vrcp.pop %v1882
  %v2349 = vmul.f32 %v1882, %v2348
  %v2350 = vsub.f32 1.0, %v2349
  %v2351 = vmul.f32 %v2348, %v2350
  %v2352 = vadd.f32 %v2348, %v2351
  %vm2353 = vweird.f32 %v1882
  %vm2354 = vweird.f32 %v2348
  %vm2355 = vmor %vm2353, %vm2354
  %v2356 = vsel %vm2355, %v2348, %v2352
  %v2357 = vand.u32 2147483647, %v1882
  %vm2358 = vcmp.eq.f32.partialorder %v2357, 8.507059e+37
  %v2359 = vand.u32 %v1882, 2147483648
  %v2360 = vor.u32 1.1754944e-38, %v2359
  %v2361 = vsel %vm2358, %v2360, %v2356
  %v2362 = vmul.f32 %v1730, %v2361
  %v2363 = vrcp.pop %v1885
  %v2364 = vmul.f32 %v1885, %v2363
  %v2365 = vsub.f32 1.0, %v2364
  %v2366 = vmul.f32 %v2363, %v2365
  %v2367 = vadd.f32 %v2363, %v2366
  %vm2368 = vweird.f32 %v1885
  %vm2369 = vweird.f32 %v2363
  %vm2370 = vmor %vm2368, %vm2369
  %v2371 = vsel %vm2370, %v2363, %v2367
  %v2372 = vand.u32 2147483647, %v1885
  %vm2373 = vcmp.eq.f32.partialorder %v2372, 8.507059e+37
  %v2374 = vand.u32 %v1885, 2147483648
  %v2375 = vor.u32 1.1754944e-38, %v2374
  %v2376 = vsel %vm2373, %v2375, %v2371
  %v2377 = vmul.f32 %v1732, %v2376
  %v2378 = vrcp.pop %v1888
  %v2379 = vmul.f32 %v1888, %v2378
  %v2380 = vsub.f32 1.0, %v2379
  %v2381 = vmul.f32 %v2378, %v2380
  %v2382 = vadd.f32 %v2378, %v2381
  %vm2383 = vweird.f32 %v1888
  %vm2384 = vweird.f32 %v2378
  %vm2385 = vmor %vm2383, %vm2384
  %v2386 = vsel %vm2385, %v2378, %v2382
  %v2387 = vand.u32 2147483647, %v1888
  %vm2388 = vcmp.eq.f32.partialorder %v2387, 8.507059e+37
  %v2389 = vand.u32 %v1888, 2147483648
  %v2390 = vor.u32 1.1754944e-38, %v2389
  %v2391 = vsel %vm2388, %v2390, %v2386
  %v2392 = vmul.f32 %v1734, %v2391
  %v2393 = vrcp.pop %v1891
  %v2394 = vmul.f32 %v1891, %v2393
  %v2395 = vsub.f32 1.0, %v2394
  %v2396 = vmul.f32 %v2393, %v2395
  %v2397 = vadd.f32 %v2393, %v2396
  %vm2398 = vweird.f32 %v1891
  %vm2399 = vweird.f32 %v2393
  %vm2400 = vmor %vm2398, %vm2399
  %v2401 = vsel %vm2400, %v2393, %v2397
  %v2402 = vand.u32 2147483647, %v1891
  %vm2403 = vcmp.eq.f32.partialorder %v2402, 8.507059e+37
  %v2404 = vand.u32 %v1891, 2147483648
  %v2405 = vor.u32 1.1754944e-38, %v2404
  %v2406 = vsel %vm2403, %v2405, %v2401
  %v2407 = vmul.f32 %v1736, %v2406
  %v2408 = vrcp.pop %v1894
  %v2409 = vmul.f32 %v1894, %v2408
  %v2410 = vsub.f32 1.0, %v2409
  %v2411 = vmul.f32 %v2408, %v2410
  %v2412 = vadd.f32 %v2408, %v2411
  %vm2413 = vweird.f32 %v1894
  %vm2414 = vweird.f32 %v2408
  %vm2415 = vmor %vm2413, %vm2414
  %v2416 = vsel %vm2415, %v2408, %v2412
  %v2417 = vand.u32 2147483647, %v1894
  %vm2418 = vcmp.eq.f32.partialorder %v2417, 8.507059e+37
  %v2419 = vand.u32 %v1894, 2147483648
  %v2420 = vor.u32 1.1754944e-38, %v2419
  %v2421 = vsel %vm2418, %v2420, %v2416
  %v2422 = vmul.f32 %v1738, %v2421
  %v2423 = vrcp.pop %v1897
  %v2424 = vmul.f32 %v1897, %v2423
  %v2425 = vsub.f32 1.0, %v2424
  %v2426 = vmul.f32 %v2423, %v2425
  %v2427 = vadd.f32 %v2423, %v2426
  %vm2428 = vweird.f32 %v1897
  %vm2429 = vweird.f32 %v2423
  %vm2430 = vmor %vm2428, %vm2429
  %v2431 = vsel %vm2430, %v2423, %v2427
  %v2432 = vand.u32 2147483647, %v1897
  %vm2433 = vcmp.eq.f32.partialorder %v2432, 8.507059e+37
  %v2434 = vand.u32 %v1897, 2147483648
  %v2435 = vor.u32 1.1754944e-38, %v2434
  %v2436 = vsel %vm2433, %v2435, %v2431
  %v2437 = vmul.f32 %v1740, %v2436
  %v2438 = vrcp.pop %v1900
  %v2439 = vmul.f32 %v1900, %v2438
  %v2440 = vsub.f32 1.0, %v2439
  %v2441 = vmul.f32 %v2438, %v2440
  %v2442 = vadd.f32 %v2438, %v2441
  %vm2443 = vweird.f32 %v1900
  %vm2444 = vweird.f32 %v2438
  %vm2445 = vmor %vm2443, %vm2444
  %v2446 = vsel %vm2445, %v2438, %v2442
  %v2447 = vand.u32 2147483647, %v1900
  %vm2448 = vcmp.eq.f32.partialorder %v2447, 8.507059e+37
  %v2449 = vand.u32 %v1900, 2147483648
  %v2450 = vor.u32 1.1754944e-38, %v2449
  %v2451 = vsel %vm2448, %v2450, %v2446
  %v2452 = vmul.f32 %v1742, %v2451
  %v2453 = vrcp.pop %v1903
  %v2454 = vmul.f32 %v1903, %v2453
  %v2455 = vsub.f32 1.0, %v2454
  %v2456 = vmul.f32 %v2453, %v2455
  %v2457 = vadd.f32 %v2453, %v2456
  %vm2458 = vweird.f32 %v1903
  %vm2459 = vweird.f32 %v2453
  %vm2460 = vmor %vm2458, %vm2459
  %v2461 = vsel %vm2460, %v2453, %v2457
  %v2462 = vand.u32 2147483647, %v1903
  %vm2463 = vcmp.eq.f32.partialorder %v2462, 8.507059e+37
  %v2464 = vand.u32 %v1903, 2147483648
  %v2465 = vor.u32 1.1754944e-38, %v2464
  %v2466 = vsel %vm2463, %v2465, %v2461
  %v2467 = vmul.f32 %v1744, %v2466
  %v2468 = vrcp.pop %v1906
  %v2469 = vmul.f32 %v1906, %v2468
  %v2470 = vsub.f32 1.0, %v2469
  %v2471 = vmul.f32 %v2468, %v2470
  %v2472 = vadd.f32 %v2468, %v2471
  %vm2473 = vweird.f32 %v1906
  %vm2474 = vweird.f32 %v2468
  %vm2475 = vmor %vm2473, %vm2474
  %v2476 = vsel %vm2475, %v2468, %v2472
  %v2477 = vand.u32 2147483647, %v1906
  %vm2478 = vcmp.eq.f32.partialorder %v2477, 8.507059e+37
  %v2479 = vand.u32 %v1906, 2147483648
  %v2480 = vor.u32 1.1754944e-38, %v2479
  %v2481 = vsel %vm2478, %v2480, %v2476
  %v2482 = vmul.f32 %v1746, %v2481
  %v2483 = vrcp.pop %v1909
  %v2484 = vmul.f32 %v1909, %v2483
  %v2485 = vsub.f32 1.0, %v2484
  %v2486 = vmul.f32 %v2483, %v2485
  %v2487 = vadd.f32 %v2483, %v2486
  %vm2488 = vweird.f32 %v1909
  %vm2489 = vweird.f32 %v2483
  %vm2490 = vmor %vm2488, %vm2489
  %v2491 = vsel %vm2490, %v2483, %v2487
  %v2492 = vand.u32 2147483647, %v1909
  %vm2493 = vcmp.eq.f32.partialorder %v2492, 8.507059e+37
  %v2494 = vand.u32 %v1909, 2147483648
  %v2495 = vor.u32 1.1754944e-38, %v2494
  %v2496 = vsel %vm2493, %v2495, %v2491
  %v2497 = vmul.f32 %v1748, %v2496
  %v2498 = vrcp.pop %v1912
  %v2499 = vmul.f32 %v1912, %v2498
  %v2500 = vsub.f32 1.0, %v2499
  %v2501 = vmul.f32 %v2498, %v2500
  %v2502 = vadd.f32 %v2498, %v2501
  %vm2503 = vweird.f32 %v1912
  %vm2504 = vweird.f32 %v2498
  %vm2505 = vmor %vm2503, %vm2504
  %v2506 = vsel %vm2505, %v2498, %v2502
  %v2507 = vand.u32 2147483647, %v1912
  %vm2508 = vcmp.eq.f32.partialorder %v2507, 8.507059e+37
  %v2509 = vand.u32 %v1912, 2147483648
  %v2510 = vor.u32 1.1754944e-38, %v2509
  %v2511 = vsel %vm2508, %v2510, %v2506
  %v2512 = vmul.f32 %v1750, %v2511
  %v2513 = vrcp.pop %v1915
  %v2514 = vmul.f32 %v1915, %v2513
  %v2515 = vsub.f32 1.0, %v2514
  %v2516 = vmul.f32 %v2513, %v2515
  %v2517 = vadd.f32 %v2513, %v2516
  %vm2518 = vweird.f32 %v1915
  %vm2519 = vweird.f32 %v2513
  %vm2520 = vmor %vm2518, %vm2519
  %v2521 = vsel %vm2520, %v2513, %v2517
  %v2522 = vand.u32 2147483647, %v1915
  %vm2523 = vcmp.eq.f32.partialorder %v2522, 8.507059e+37
  %v2524 = vand.u32 %v1915, 2147483648
  %v2525 = vor.u32 1.1754944e-38, %v2524
  %v2526 = vsel %vm2523, %v2525, %v2521
  %v2527 = vmul.f32 %v1752, %v2526
  %v2528 = vrcp.pop %v1918
  %v2529 = vmul.f32 %v1918, %v2528
  %v2530 = vsub.f32 1.0, %v2529
  %v2531 = vmul.f32 %v2528, %v2530
  %v2532 = vadd.f32 %v2528, %v2531
  %vm2533 = vweird.f32 %v1918
  %vm2534 = vweird.f32 %v2528
  %vm2535 = vmor %vm2533, %vm2534
  %v2536 = vsel %vm2535, %v2528, %v2532
  %v2537 = vand.u32 2147483647, %v1918
  %vm2538 = vcmp.eq.f32.partialorder %v2537, 8.507059e+37
  %v2539 = vand.u32 %v1918, 2147483648
  %v2540 = vor.u32 1.1754944e-38, %v2539
  %v2541 = vsel %vm2538, %v2540, %v2536
  %v2542 = vmul.f32 %v1754, %v2541
  %v2543 = vrcp.pop %v1921
  %v2544 = vmul.f32 %v1921, %v2543
  %v2545 = vsub.f32 1.0, %v2544
  %v2546 = vmul.f32 %v2543, %v2545
  %v2547 = vadd.f32 %v2543, %v2546
  %vm2548 = vweird.f32 %v1921
  %vm2549 = vweird.f32 %v2543
  %vm2550 = vmor %vm2548, %vm2549
  %v2551 = vsel %vm2550, %v2543, %v2547
  %v2552 = vand.u32 2147483647, %v1921
  %vm2553 = vcmp.eq.f32.partialorder %v2552, 8.507059e+37
  %v2554 = vand.u32 %v1921, 2147483648
  %v2555 = vor.u32 1.1754944e-38, %v2554
  %v2556 = vsel %vm2553, %v2555, %v2551
  %v2557 = vmul.f32 %v1756, %v2556
  %v2558 = vrcp.pop %v1924
  %v2559 = vmul.f32 %v1924, %v2558
  %v2560 = vsub.f32 1.0, %v2559
  %v2561 = vmul.f32 %v2558, %v2560
  %v2562 = vadd.f32 %v2558, %v2561
  %vm2563 = vweird.f32 %v1924
  %vm2564 = vweird.f32 %v2558
  %vm2565 = vmor %vm2563, %vm2564
  %v2566 = vsel %vm2565, %v2558, %v2562
  %v2567 = vand.u32 2147483647, %v1924
  %vm2568 = vcmp.eq.f32.partialorder %v2567, 8.507059e+37
  %v2569 = vand.u32 %v1924, 2147483648
  %v2570 = vor.u32 1.1754944e-38, %v2569
  %v2571 = vsel %vm2568, %v2570, %v2566
  %v2572 = vmul.f32 %v1758, %v2571
  %v2573 = vrcp.pop %v1927
  %v2574 = vmul.f32 %v1927, %v2573
  %v2575 = vsub.f32 1.0, %v2574
  %v2576 = vmul.f32 %v2573, %v2575
  %v2577 = vadd.f32 %v2573, %v2576
  %vm2578 = vweird.f32 %v1927
  %vm2579 = vweird.f32 %v2573
  %vm2580 = vmor %vm2578, %vm2579
  %v2581 = vsel %vm2580, %v2573, %v2577
  %v2582 = vand.u32 2147483647, %v1927
  %vm2583 = vcmp.eq.f32.partialorder %v2582, 8.507059e+37
  %v2584 = vand.u32 %v1927, 2147483648
  %v2585 = vor.u32 1.1754944e-38, %v2584
  %v2586 = vsel %vm2583, %v2585, %v2581
  %v2587 = vmul.f32 %v1760, %v2586
  %v2588 = vrcp.pop %v1930
  %v2589 = vmul.f32 %v1930, %v2588
  %v2590 = vsub.f32 1.0, %v2589
  %v2591 = vmul.f32 %v2588, %v2590
  %v2592 = vadd.f32 %v2588, %v2591
  %vm2593 = vweird.f32 %v1930
  %vm2594 = vweird.f32 %v2588
  %vm2595 = vmor %vm2593, %vm2594
  %v2596 = vsel %vm2595, %v2588, %v2592
  %v2597 = vand.u32 2147483647, %v1930
  %vm2598 = vcmp.eq.f32.partialorder %v2597, 8.507059e+37
  %v2599 = vand.u32 %v1930, 2147483648
  %v2600 = vor.u32 1.1754944e-38, %v2599
  %v2601 = vsel %vm2598, %v2600, %v2596
  %v2602 = vmul.f32 %v1762, %v2601
  %v2603 = vrcp.pop %v1933
  %v2604 = vmul.f32 %v1933, %v2603
  %v2605 = vsub.f32 1.0, %v2604
  %v2606 = vmul.f32 %v2603, %v2605
  %v2607 = vadd.f32 %v2603, %v2606
  %vm2608 = vweird.f32 %v1933
  %vm2609 = vweird.f32 %v2603
  %vm2610 = vmor %vm2608, %vm2609
  %v2611 = vsel %vm2610, %v2603, %v2607
  %v2612 = vand.u32 2147483647, %v1933
  %vm2613 = vcmp.eq.f32.partialorder %v2612, 8.507059e+37
  %v2614 = vand.u32 %v1933, 2147483648
  %v2615 = vor.u32 1.1754944e-38, %v2614
  %v2616 = vsel %vm2613, %v2615, %v2611
  %v2617 = vmul.f32 %v1764, %v2616
  %v2618 = vrcp.pop %v1936
  %v2619 = vmul.f32 %v1936, %v2618
  %v2620 = vsub.f32 1.0, %v2619
  %v2621 = vmul.f32 %v2618, %v2620
  %v2622 = vadd.f32 %v2618, %v2621
  %vm2623 = vweird.f32 %v1936
  %vm2624 = vweird.f32 %v2618
  %vm2625 = vmor %vm2623, %vm2624
  %v2626 = vsel %vm2625, %v2618, %v2622
  %v2627 = vand.u32 2147483647, %v1936
  %vm2628 = vcmp.eq.f32.partialorder %v2627, 8.507059e+37
  %v2629 = vand.u32 %v1936, 2147483648
  %v2630 = vor.u32 1.1754944e-38, %v2629
  %v2631 = vsel %vm2628, %v2630, %v2626
  %v2632 = vmul.f32 %v1766, %v2631
  %v2633 = vrcp.pop %v1939
  %v2634 = vmul.f32 %v1939, %v2633
  %v2635 = vsub.f32 1.0, %v2634
  %v2636 = vmul.f32 %v2633, %v2635
  %v2637 = vadd.f32 %v2633, %v2636
  %vm2638 = vweird.f32 %v1939
  %vm2639 = vweird.f32 %v2633
  %vm2640 = vmor %vm2638, %vm2639
  %v2641 = vsel %vm2640, %v2633, %v2637
  %v2642 = vand.u32 2147483647, %v1939
  %vm2643 = vcmp.eq.f32.partialorder %v2642, 8.507059e+37
  %v2644 = vand.u32 %v1939, 2147483648
  %v2645 = vor.u32 1.1754944e-38, %v2644
  %v2646 = vsel %vm2643, %v2645, %v2641
  %v2647 = vmul.f32 %v1768, %v2646
  %v2648 = vrcp.pop %v1942
  %v2649 = vmul.f32 %v1942, %v2648
  %v2650 = vsub.f32 1.0, %v2649
  %v2651 = vmul.f32 %v2648, %v2650
  %v2652 = vadd.f32 %v2648, %v2651
  %vm2653 = vweird.f32 %v1942
  %vm2654 = vweird.f32 %v2648
  %vm2655 = vmor %vm2653, %vm2654
  %v2656 = vsel %vm2655, %v2648, %v2652
  %v2657 = vand.u32 2147483647, %v1942
  %vm2658 = vcmp.eq.f32.partialorder %v2657, 8.507059e+37
  %v2659 = vand.u32 %v1942, 2147483648
  %v2660 = vor.u32 1.1754944e-38, %v2659
  %v2661 = vsel %vm2658, %v2660, %v2656
  %v2662 = vmul.f32 %v1770, %v2661
  %v2663 = vrcp.pop %v1945
  %v2664 = vmul.f32 %v1945, %v2663
  %v2665 = vsub.f32 1.0, %v2664
  %v2666 = vmul.f32 %v2663, %v2665
  %v2667 = vadd.f32 %v2663, %v2666
  %vm2668 = vweird.f32 %v1945
  %vm2669 = vweird.f32 %v2663
  %vm2670 = vmor %vm2668, %vm2669
  %v2671 = vsel %vm2670, %v2663, %v2667
  %v2672 = vand.u32 2147483647, %v1945
  %vm2673 = vcmp.eq.f32.partialorder %v2672, 8.507059e+37
  %v2674 = vand.u32 %v1945, 2147483648
  %v2675 = vor.u32 1.1754944e-38, %v2674
  %v2676 = vsel %vm2673, %v2675, %v2671
  %v2677 = vmul.f32 %v1772, %v2676
  %v2678 = vrcp.pop %v1948
  %v2679 = vmul.f32 %v1948, %v2678
  %v2680 = vsub.f32 1.0, %v2679
  %v2681 = vmul.f32 %v2678, %v2680
  %v2682 = vadd.f32 %v2678, %v2681
  %vm2683 = vweird.f32 %v1948
  %vm2684 = vweird.f32 %v2678
  %vm2685 = vmor %vm2683, %vm2684
  %v2686 = vsel %vm2685, %v2678, %v2682
  %v2687 = vand.u32 2147483647, %v1948
  %vm2688 = vcmp.eq.f32.partialorder %v2687, 8.507059e+37
  %v2689 = vand.u32 %v1948, 2147483648
  %v2690 = vor.u32 1.1754944e-38, %v2689
  %v2691 = vsel %vm2688, %v2690, %v2686
  %v2692 = vmul.f32 %v1774, %v2691
  %v2693 = vrcp.pop %v1951
  %v2694 = vmul.f32 %v1951, %v2693
  %v2695 = vsub.f32 1.0, %v2694
  %v2696 = vmul.f32 %v2693, %v2695
  %v2697 = vadd.f32 %v2693, %v2696
  %vm2698 = vweird.f32 %v1951
  %vm2699 = vweird.f32 %v2693
  %vm2700 = vmor %vm2698, %vm2699
  %v2701 = vsel %vm2700, %v2693, %v2697
  %v2702 = vand.u32 2147483647, %v1951
  %vm2703 = vcmp.eq.f32.partialorder %v2702, 8.507059e+37
  %v2704 = vand.u32 %v1951, 2147483648
  %v2705 = vor.u32 1.1754944e-38, %v2704
  %v2706 = vsel %vm2703, %v2705, %v2701
  %v2707 = vmul.f32 %v1776, %v2706
  %v2708 = vrcp.pop %v1954
  %v2709 = vmul.f32 %v1954, %v2708
  %v2710 = vsub.f32 1.0, %v2709
  %v2711 = vmul.f32 %v2708, %v2710
  %v2712 = vadd.f32 %v2708, %v2711
  %vm2713 = vweird.f32 %v1954
  %vm2714 = vweird.f32 %v2708
  %vm2715 = vmor %vm2713, %vm2714
  %v2716 = vsel %vm2715, %v2708, %v2712
  %v2717 = vand.u32 2147483647, %v1954
  %vm2718 = vcmp.eq.f32.partialorder %v2717, 8.507059e+37
  %v2719 = vand.u32 %v1954, 2147483648
  %v2720 = vor.u32 1.1754944e-38, %v2719
  %v2721 = vsel %vm2718, %v2720, %v2716
  %v2722 = vmul.f32 %v1778, %v2721
  %v2723 = vrcp.pop %v1957
  %v2724 = vmul.f32 %v1957, %v2723
  %v2725 = vsub.f32 1.0, %v2724
  %v2726 = vmul.f32 %v2723, %v2725
  %v2727 = vadd.f32 %v2723, %v2726
  %vm2728 = vweird.f32 %v1957
  %vm2729 = vweird.f32 %v2723
  %vm2730 = vmor %vm2728, %vm2729
  %v2731 = vsel %vm2730, %v2723, %v2727
  %v2732 = vand.u32 2147483647, %v1957
  %vm2733 = vcmp.eq.f32.partialorder %v2732, 8.507059e+37
  %v2734 = vand.u32 %v1957, 2147483648
  %v2735 = vor.u32 1.1754944e-38, %v2734
  %v2736 = vsel %vm2733, %v2735, %v2731
  %v2737 = vmul.f32 %v1780, %v2736
  %v2738 = vrcp.pop %v1960
  %v2739 = vmul.f32 %v1960, %v2738
  %v2740 = vsub.f32 1.0, %v2739
  %v2741 = vmul.f32 %v2738, %v2740
  %v2742 = vadd.f32 %v2738, %v2741
  %vm2743 = vweird.f32 %v1960
  %vm2744 = vweird.f32 %v2738
  %vm2745 = vmor %vm2743, %vm2744
  %v2746 = vsel %vm2745, %v2738, %v2742
  %v2747 = vand.u32 2147483647, %v1960
  %vm2748 = vcmp.eq.f32.partialorder %v2747, 8.507059e+37
  %v2749 = vand.u32 %v1960, 2147483648
  %v2750 = vor.u32 1.1754944e-38, %v2749
  %v2751 = vsel %vm2748, %v2750, %v2746
  %v2752 = vmul.f32 %v1782, %v2751
  %v2753 = vrcp.pop %v1963
  %v2754 = vmul.f32 %v1963, %v2753
  %v2755 = vsub.f32 1.0, %v2754
  %v2756 = vmul.f32 %v2753, %v2755
  %v2757 = vadd.f32 %v2753, %v2756
  %vm2758 = vweird.f32 %v1963
  %vm2759 = vweird.f32 %v2753
  %vm2760 = vmor %vm2758, %vm2759
  %v2761 = vsel %vm2760, %v2753, %v2757
  %v2762 = vand.u32 2147483647, %v1963
  %vm2763 = vcmp.eq.f32.partialorder %v2762, 8.507059e+37
  %v2764 = vand.u32 %v1963, 2147483648
  %v2765 = vor.u32 1.1754944e-38, %v2764
  %v2766 = vsel %vm2763, %v2765, %v2761
  %v2767 = vmul.f32 %v1784, %v2766
  %v2768 = vrcp.pop %v1966
  %v2769 = vmul.f32 %v1966, %v2768
  %v2770 = vsub.f32 1.0, %v2769
  %v2771 = vmul.f32 %v2768, %v2770
  %v2772 = vadd.f32 %v2768, %v2771
  %vm2773 = vweird.f32 %v1966
  %vm2774 = vweird.f32 %v2768
  %vm2775 = vmor %vm2773, %vm2774
  %v2776 = vsel %vm2775, %v2768, %v2772
  %v2777 = vand.u32 2147483647, %v1966
  %vm2778 = vcmp.eq.f32.partialorder %v2777, 8.507059e+37
  %v2779 = vand.u32 %v1966, 2147483648
  %v2780 = vor.u32 1.1754944e-38, %v2779
  %v2781 = vsel %vm2778, %v2780, %v2776
  %v2782 = vmul.f32 %v1786, %v2781
  %v2783 = vrcp.pop %v1969
  %v2784 = vmul.f32 %v1969, %v2783
  %v2785 = vsub.f32 1.0, %v2784
  %v2786 = vmul.f32 %v2783, %v2785
  %v2787 = vadd.f32 %v2783, %v2786
  %vm2788 = vweird.f32 %v1969
  %vm2789 = vweird.f32 %v2783
  %vm2790 = vmor %vm2788, %vm2789
  %v2791 = vsel %vm2790, %v2783, %v2787
  %v2792 = vand.u32 2147483647, %v1969
  %vm2793 = vcmp.eq.f32.partialorder %v2792, 8.507059e+37
  %v2794 = vand.u32 %v1969, 2147483648
  %v2795 = vor.u32 1.1754944e-38, %v2794
  %v2796 = vsel %vm2793, %v2795, %v2791
  %v2797 = vmul.f32 %v1788, %v2796
  %v2798 = vrcp.pop %v1972
  %v2799 = vmul.f32 %v1972, %v2798
  %v2800 = vsub.f32 1.0, %v2799
  %v2801 = vmul.f32 %v2798, %v2800
  %v2802 = vadd.f32 %v2798, %v2801
  %vm2803 = vweird.f32 %v1972
  %vm2804 = vweird.f32 %v2798
  %vm2805 = vmor %vm2803, %vm2804
  %v2806 = vsel %vm2805, %v2798, %v2802
  %v2807 = vand.u32 2147483647, %v1972
  %vm2808 = vcmp.eq.f32.partialorder %v2807, 8.507059e+37
  %v2809 = vand.u32 %v1972, 2147483648
  %v2810 = vor.u32 1.1754944e-38, %v2809
  %v2811 = vsel %vm2808, %v2810, %v2806
  %v2812 = vmul.f32 %v1790, %v2811
  %v2813 = vrcp.pop %v1975
  %v2814 = vmul.f32 %v1975, %v2813
  %v2815 = vsub.f32 1.0, %v2814
  %v2816 = vmul.f32 %v2813, %v2815
  %v2817 = vadd.f32 %v2813, %v2816
  %vm2818 = vweird.f32 %v1975
  %vm2819 = vweird.f32 %v2813
  %vm2820 = vmor %vm2818, %vm2819
  %v2821 = vsel %vm2820, %v2813, %v2817
  %v2822 = vand.u32 2147483647, %v1975
  %vm2823 = vcmp.eq.f32.partialorder %v2822, 8.507059e+37
  %v2824 = vand.u32 %v1975, 2147483648
  %v2825 = vor.u32 1.1754944e-38, %v2824
  %v2826 = vsel %vm2823, %v2825, %v2821
  %v2827 = vmul.f32 %v1792, %v2826
  %v2828 = vrcp.pop %v1978
  %v2829 = vmul.f32 %v1978, %v2828
  %v2830 = vsub.f32 1.0, %v2829
  %v2831 = vmul.f32 %v2828, %v2830
  %v2832 = vadd.f32 %v2828, %v2831
  %vm2833 = vweird.f32 %v1978
  %vm2834 = vweird.f32 %v2828
  %vm2835 = vmor %vm2833, %vm2834
  %v2836 = vsel %vm2835, %v2828, %v2832
  %v2837 = vand.u32 2147483647, %v1978
  %vm2838 = vcmp.eq.f32.partialorder %v2837, 8.507059e+37
  %v2839 = vand.u32 %v1978, 2147483648
  %v2840 = vor.u32 1.1754944e-38, %v2839
  %v2841 = vsel %vm2838, %v2840, %v2836
  %v2842 = vmul.f32 %v1794, %v2841
  %v2843 = vrcp.pop %v1981
  %v2844 = vmul.f32 %v1981, %v2843
  %v2845 = vsub.f32 1.0, %v2844
  %v2846 = vmul.f32 %v2843, %v2845
  %v2847 = vadd.f32 %v2843, %v2846
  %vm2848 = vweird.f32 %v1981
  %vm2849 = vweird.f32 %v2843
  %vm2850 = vmor %vm2848, %vm2849
  %v2851 = vsel %vm2850, %v2843, %v2847
  %v2852 = vand.u32 2147483647, %v1981
  %vm2853 = vcmp.eq.f32.partialorder %v2852, 8.507059e+37
  %v2854 = vand.u32 %v1981, 2147483648
  %v2855 = vor.u32 1.1754944e-38, %v2854
  %v2856 = vsel %vm2853, %v2855, %v2851
  %v2857 = vmul.f32 %v1796, %v2856
  %v2858 = vrcp.pop %v1984
  %v2859 = vmul.f32 %v1984, %v2858
  %v2860 = vsub.f32 1.0, %v2859
  %v2861 = vmul.f32 %v2858, %v2860
  %v2862 = vadd.f32 %v2858, %v2861
  %vm2863 = vweird.f32 %v1984
  %vm2864 = vweird.f32 %v2858
  %vm2865 = vmor %vm2863, %vm2864
  %v2866 = vsel %vm2865, %v2858, %v2862
  %v2867 = vand.u32 2147483647, %v1984
  %vm2868 = vcmp.eq.f32.partialorder %v2867, 8.507059e+37
  %v2869 = vand.u32 %v1984, 2147483648
  %v2870 = vor.u32 1.1754944e-38, %v2869
  %v2871 = vsel %vm2868, %v2870, %v2866
  %v2872 = vmul.f32 %v1798, %v2871
  %v2873 = vrcp.pop %v1987
  %v2874 = vmul.f32 %v1987, %v2873
  %v2875 = vsub.f32 1.0, %v2874
  %v2876 = vmul.f32 %v2873, %v2875
  %v2877 = vadd.f32 %v2873, %v2876
  %vm2878 = vweird.f32 %v1987
  %vm2879 = vweird.f32 %v2873
  %vm2880 = vmor %vm2878, %vm2879
  %v2881 = vsel %vm2880, %v2873, %v2877
  %v2882 = vand.u32 2147483647, %v1987
  %vm2883 = vcmp.eq.f32.partialorder %v2882, 8.507059e+37
  %v2884 = vand.u32 %v1987, 2147483648
  %v2885 = vor.u32 1.1754944e-38, %v2884
  %v2886 = vsel %vm2883, %v2885, %v2881
  %v2887 = vmul.f32 %v1800, %v2886
  %v2888 = vrcp.pop %v1990
  %v2889 = vmul.f32 %v1990, %v2888
  %v2890 = vsub.f32 1.0, %v2889
  %v2891 = vmul.f32 %v2888, %v2890
  %v2892 = vadd.f32 %v2888, %v2891
  %vm2893 = vweird.f32 %v1990
  %vm2894 = vweird.f32 %v2888
  %vm2895 = vmor %vm2893, %vm2894
  %v2896 = vsel %vm2895, %v2888, %v2892
  %v2897 = vand.u32 2147483647, %v1990
  %vm2898 = vcmp.eq.f32.partialorder %v2897, 8.507059e+37
  %v2899 = vand.u32 %v1990, 2147483648
  %v2900 = vor.u32 1.1754944e-38, %v2899
  %v2901 = vsel %vm2898, %v2900, %v2896
  %v2902 = vmul.f32 %v1802, %v2901
  %v2903 = vrcp.pop %v1993
  %v2904 = vmul.f32 %v1993, %v2903
  %v2905 = vsub.f32 1.0, %v2904
  %v2906 = vmul.f32 %v2903, %v2905
  %v2907 = vadd.f32 %v2903, %v2906
  %vm2908 = vweird.f32 %v1993
  %vm2909 = vweird.f32 %v2903
  %vm2910 = vmor %vm2908, %vm2909
  %v2911 = vsel %vm2910, %v2903, %v2907
  %v2912 = vand.u32 2147483647, %v1993
  %vm2913 = vcmp.eq.f32.partialorder %v2912, 8.507059e+37
  %v2914 = vand.u32 %v1993, 2147483648
  %v2915 = vor.u32 1.1754944e-38, %v2914
  %v2916 = vsel %vm2913, %v2915, %v2911
  %v2917 = vmul.f32 %v1804, %v2916
  %v2918 = vrcp.pop %v1996
  %v2919 = vmul.f32 %v1996, %v2918
  %v2920 = vsub.f32 1.0, %v2919
  %v2921 = vmul.f32 %v2918, %v2920
  %v2922 = vadd.f32 %v2918, %v2921
  %vm2923 = vweird.f32 %v1996
  %vm2924 = vweird.f32 %v2918
  %vm2925 = vmor %vm2923, %vm2924
  %v2926 = vsel %vm2925, %v2918, %v2922
  %v2927 = vand.u32 2147483647, %v1996
  %vm2928 = vcmp.eq.f32.partialorder %v2927, 8.507059e+37
  %v2929 = vand.u32 %v1996, 2147483648
  %v2930 = vor.u32 1.1754944e-38, %v2929
  %v2931 = vsel %vm2928, %v2930, %v2926
  %v2932 = vmul.f32 %v1806, %v2931
  %v2933 = vrcp.pop %v1999
  %v2934 = vmul.f32 %v1999, %v2933
  %v2935 = vsub.f32 1.0, %v2934
  %v2936 = vmul.f32 %v2933, %v2935
  %v2937 = vadd.f32 %v2933, %v2936
  %vm2938 = vweird.f32 %v1999
  %vm2939 = vweird.f32 %v2933
  %vm2940 = vmor %vm2938, %vm2939
  %v2941 = vsel %vm2940, %v2933, %v2937
  %v2942 = vand.u32 2147483647, %v1999
  %vm2943 = vcmp.eq.f32.partialorder %v2942, 8.507059e+37
  %v2944 = vand.u32 %v1999, 2147483648
  %v2945 = vor.u32 1.1754944e-38, %v2944
  %v2946 = vsel %vm2943, %v2945, %v2941
  %v2947 = vmul.f32 %v1808, %v2946
  %v2948 = vrcp.pop %v2002
  %v2949 = vmul.f32 %v2002, %v2948
  %v2950 = vsub.f32 1.0, %v2949
  %v2951 = vmul.f32 %v2948, %v2950
  %v2952 = vadd.f32 %v2948, %v2951
  %vm2953 = vweird.f32 %v2002
  %vm2954 = vweird.f32 %v2948
  %vm2955 = vmor %vm2953, %vm2954
  %v2956 = vsel %vm2955, %v2948, %v2952
  %v2957 = vand.u32 2147483647, %v2002
  %vm2958 = vcmp.eq.f32.partialorder %v2957, 8.507059e+37
  %v2959 = vand.u32 %v2002, 2147483648
  %v2960 = vor.u32 1.1754944e-38, %v2959
  %v2961 = vsel %vm2958, %v2960, %v2956
  %v2962 = vmul.f32 %v1810, %v2961
  %vm2963 = vcmask 15360
  %2964 = vst.msk [vmem:[%s2] sm:$0xff] %vm2963, %v2017
  %2965 = vst.msk [vmem:[%s2 + $0x8] sm:$0xff] %vm2963, %v2032
  %2966 = vst.msk [vmem:[%s2 + $0x10] sm:$0xff] %vm2963, %v2047
  %2967 = vst.msk [vmem:[%s2 + $0x18] sm:$0xff] %vm2963, %v2062
  %2968 = vst.msk [vmem:[%s2 + $0x20] sm:$0xff] %vm2963, %v2077
  %2969 = vst.msk [vmem:[%s2 + $0x28] sm:$0xff] %vm2963, %v2092
  %2970 = vst.msk [vmem:[%s2 + $0x30] sm:$0xff] %vm2963, %v2107
  %2971 = vst.msk [vmem:[%s2 + $0x38] sm:$0xff] %vm2963, %v2122
  %2972 = vst.msk [vmem:[%s2 + $0x40] sm:$0xff] %vm2963, %v2137
  %2973 = vst.msk [vmem:[%s2 + $0x48] sm:$0xff] %vm2963, %v2152
  %2974 = vst.msk [vmem:[%s2 + $0x50] sm:$0xff] %vm2963, %v2167
  %2975 = vst.msk [vmem:[%s2 + $0x58] sm:$0xff] %vm2963, %v2182
  %2976 = vst.msk [vmem:[%s2 + $0x60] sm:$0xff] %vm2963, %v2197
  %2977 = vst.msk [vmem:[%s2 + $0x68] sm:$0xff] %vm2963, %v2212
  %2978 = vst.msk [vmem:[%s2 + $0x70] sm:$0xff] %vm2963, %v2227
  %2979 = vst.msk [vmem:[%s2 + $0x78] sm:$0xff] %vm2963, %v2242
  %2980 = vst.msk [vmem:[%s2 + $0x80] sm:$0xff] %vm2963, %v2257
  %2981 = vst.msk [vmem:[%s2 + $0x88] sm:$0xff] %vm2963, %v2272
  %2982 = vst.msk [vmem:[%s2 + $0x90] sm:$0xff] %vm2963, %v2287
  %2983 = vst.msk [vmem:[%s2 + $0x98] sm:$0xff] %vm2963, %v2302
  %2984 = vst.msk [vmem:[%s2 + $0xa0] sm:$0xff] %vm2963, %v2317
  %2985 = vst.msk [vmem:[%s2 + $0xa8] sm:$0xff] %vm2963, %v2332
  %2986 = vst.msk [vmem:[%s2 + $0xb0] sm:$0xff] %vm2963, %v2347
  %2987 = vst.msk [vmem:[%s2 + $0xb8] sm:$0xff] %vm2963, %v2362
  %2988 = vst.msk [vmem:[%s2 + $0xc0] sm:$0xff] %vm2963, %v2377
  %2989 = vst.msk [vmem:[%s2 + $0xc8] sm:$0xff] %vm2963, %v2392
  %2990 = vst.msk [vmem:[%s2 + $0xd0] sm:$0xff] %vm2963, %v2407
  %2991 = vst.msk [vmem:[%s2 + $0xd8] sm:$0xff] %vm2963, %v2422
  %2992 = vst.msk [vmem:[%s2 + $0xe0] sm:$0xff] %vm2963, %v2437
  %2993 = vst.msk [vmem:[%s2 + $0xe8] sm:$0xff] %vm2963, %v2452
  %2994 = vst.msk [vmem:[%s2 + $0xf0] sm:$0xff] %vm2963, %v2467
  %2995 = vst.msk [vmem:[%s2 + $0xf8] sm:$0xff] %vm2963, %v2482
  %2996 = vst.msk [vmem:[%s2 + $0x100] sm:$0xff] %vm2963, %v2497
  %2997 = vst.msk [vmem:[%s2 + $0x108] sm:$0xff] %vm2963, %v2512
  %2998 = vst.msk [vmem:[%s2 + $0x110] sm:$0xff] %vm2963, %v2527
  %2999 = vst.msk [vmem:[%s2 + $0x118] sm:$0xff] %vm2963, %v2542
  %3000 = vst.msk [vmem:[%s2 + $0x120] sm:$0xff] %vm2963, %v2557
  %3001 = vst.msk [vmem:[%s2 + $0x128] sm:$0xff] %vm2963, %v2572
  %3002 = vst.msk [vmem:[%s2 + $0x130] sm:$0xff] %vm2963, %v2587
  %3003 = vst.msk [vmem:[%s2 + $0x138] sm:$0xff] %vm2963, %v2602
  %3004 = vst.msk [vmem:[%s2 + $0x140] sm:$0xff] %vm2963, %v2617
  %3005 = vst.msk [vmem:[%s2 + $0x148] sm:$0xff] %vm2963, %v2632
  %3006 = vst.msk [vmem:[%s2 + $0x150] sm:$0xff] %vm2963, %v2647
  %3007 = vst.msk [vmem:[%s2 + $0x158] sm:$0xff] %vm2963, %v2662
  %3008 = vst.msk [vmem:[%s2 + $0x160] sm:$0xff] %vm2963, %v2677
  %3009 = vst.msk [vmem:[%s2 + $0x168] sm:$0xff] %vm2963, %v2692
  %3010 = vst.msk [vmem:[%s2 + $0x170] sm:$0xff] %vm2963, %v2707
  %3011 = vst.msk [vmem:[%s2 + $0x178] sm:$0xff] %vm2963, %v2722
  %3012 = vst.msk [vmem:[%s2 + $0x180] sm:$0xff] %vm2963, %v2737
  %3013 = vst.msk [vmem:[%s2 + $0x188] sm:$0xff] %vm2963, %v2752
  %3014 = vst.msk [vmem:[%s2 + $0x190] sm:$0xff] %vm2963, %v2767
  %3015 = vst.msk [vmem:[%s2 + $0x198] sm:$0xff] %vm2963, %v2782
  %3016 = vst.msk [vmem:[%s2 + $0x1a0] sm:$0xff] %vm2963, %v2797
  %3017 = vst.msk [vmem:[%s2 + $0x1a8] sm:$0xff] %vm2963, %v2812
  %3018 = vst.msk [vmem:[%s2 + $0x1b0] sm:$0xff] %vm2963, %v2827
  %3019 = vst.msk [vmem:[%s2 + $0x1b8] sm:$0xff] %vm2963, %v2842
  %3020 = vst.msk [vmem:[%s2 + $0x1c0] sm:$0xff] %vm2963, %v2857
  %3021 = vst.msk [vmem:[%s2 + $0x1c8] sm:$0xff] %vm2963, %v2872
  %3022 = vst.msk [vmem:[%s2 + $0x1d0] sm:$0xff] %vm2963, %v2887
  %3023 = vst.msk [vmem:[%s2 + $0x1d8] sm:$0xff] %vm2963, %v2902
  %3024 = vst.msk [vmem:[%s2 + $0x1e0] sm:$0xff] %vm2963, %v2917
  %3025 = vst.msk [vmem:[%s2 + $0x1e8] sm:$0xff] %vm2963, %v2932
  %3026 = vst.msk [vmem:[%s2 + $0x1f0] sm:$0xff] %vm2963, %v2947
  %3027 = vst.msk [vmem:[%s2 + $0x1f8] sm:$0xff] %vm2963, %v2962
  // Predicated region
  $region10: #{tpu_custom_call.1} parent=0 // pred_check
    _
  $region11: #{tpu_custom_call.1} parent=0 // pred_check_branch
    %3029 = sbr.rel (0) target = $region13
  $region12: #{tpu_custom_call.1} parent=0 // pred_region
    _
  $region13: #{tpu_custom_call.1} parent=0 // pred_fallthru
    _
  // Predicated region
  $region14: #{tpu_custom_call.1} parent=0 // pred_check
    _
  $region15: #{tpu_custom_call.1} parent=0 // pred_check_branch
    %3031 = sbr.rel (0) target = $region17
  $region16: #{tpu_custom_call.1} parent=0 // pred_region
    _
  $region17: #{tpu_custom_call.1} parent=0 // pred_fallthru
    _

</llo_original>
